<compile_context>
chip_gen: v6e
topology: v6e:2x2x1
jax: 0.10.0
libtpu: 0.0.40
codegen_flags: <defaults>
</compile_context>

<pallas_src>
import jax
import jax.numpy as jnp
from jax.experimental import pallas as pl
from jax.experimental.pallas import tpu as pltpu


def add_conv1x1_kernel(w_ref, x1_ref, x2_ref, o_ref):
    # w_ref:  (tco, Cin)  bf16   (one Cout block of the 1x1-conv weight)
    # x1_ref: (Cin, HW)   f32    (resident across the Cout grid axis)
    # x2_ref: (Cin, HW)   f32
    # o_ref:  (tco, HW)   f32
    s = (x1_ref[...] + x2_ref[...]).astype(jnp.bfloat16)
    o_ref[...] = jnp.dot(
        w_ref[...], s, preferred_element_type=jnp.float32
    ).astype(o_ref.dtype)


def add_conv1x1(x485, x471, weight, *, tco=688):
    """x485, x471: (N, C_in, H, W) f32. weight: (C_out, C_in, 1, 1) f32.

    Returns (N, C_out, H, W) f32, matching
    Conv2d(C_in, C_out, 1, bias=False)(x485 + x471), with the weight (and the
    activation sum) quantized to bf16 for HBM-bandwidth reasons; accumulation
    is f32.
    """
    N, Cin, H, W = x485.shape
    Cout = weight.shape[0]
    HW = H * W
    assert Cout % tco == 0 and tco % 16 == 0  # bf16 sublane-aligned Cout blocks
    n_cout_blocks = Cout // tco

    # Native NCHW orientation -> pure reshapes, no wrapper transposes.
    a = x485.reshape(N, Cin, HW)
    b = x471.reshape(N, Cin, HW)
    # Stream the weight as bf16 (halves the dominant HBM traffic).
    w_mat = weight.reshape(Cout, Cin).astype(jnp.bfloat16)

    flops = 2 * N * Cout * Cin * HW
    bytes_accessed = (
        Cout * Cin * 2            # bf16 weight
        + 2 * N * Cin * HW * 4    # two f32 activation tensors
        + N * Cout * HW * 4       # f32 output
    )

    out = pl.pallas_call(
        add_conv1x1_kernel,
        out_shape=jax.ShapeDtypeStruct((N, Cout, HW), x485.dtype),
        grid_spec=pltpu.PrefetchScalarGridSpec(
            num_scalar_prefetch=0,
            grid=(N, n_cout_blocks),
            in_specs=[
                # Weight: one Cout block per step -> double-buffered DMA
                # overlaps the previous block's matmul + writeback.
                pl.BlockSpec((tco, Cin), lambda n, j: (j, 0)),
                # Activations: constant index along j -> stay resident.
                pl.BlockSpec((None, Cin, HW), lambda n, j: (n, 0, 0)),
                pl.BlockSpec((None, Cin, HW), lambda n, j: (n, 0, 0)),
            ],
            out_specs=pl.BlockSpec((None, tco, HW), lambda n, j: (n, j, 0)),
        ),
        compiler_params=pltpu.CompilerParams(
            # Both axes are independent; "parallel" lets v7x megacore shard
            # the Cout blocks across its two TensorCores.
            dimension_semantics=("parallel", "parallel"),
        ),
        cost_estimate=pl.CostEstimate(
            flops=flops, transcendentals=0, bytes_accessed=bytes_accessed
        ),
    )(w_mat, a, b)

    return out.reshape(N, Cout, H, W)


if __name__ == "__main__":
    # Shapes from the PyTorch module: x485, x471: (1, 344, 7, 7); conv 344 -> 2064.
    key = jax.random.PRNGKey(0)
    k1, k2, k3 = jax.random.split(key, 3)

    N, Cin, H, W = 1, 344, 7, 7
    Cout = 2064

    x485 = jax.random.normal(k1, (N, Cin, H, W), dtype=jnp.float32)
    x471 = jax.random.normal(k2, (N, Cin, H, W), dtype=jnp.float32)
    # Deterministic Conv2d-style weight init (kaiming-uniform-like bound), bias=False.
    bound = 1.0 / (Cin ** 0.5)
    weight = jax.random.uniform(
        k3, (Cout, Cin, 1, 1), dtype=jnp.float32, minval=-bound, maxval=bound
    )

    out = add_conv1x1(x485, x471, weight)
    jax.block_until_ready(out)
    assert out.shape == (N, Cout, H, W)

    w2d = weight.reshape(Cout, Cin)
    s = x485 + x471

    # Tight check: against a reference using the exact same bf16-quantized
    # weight / activation-sum the kernel sees (validates the kernel math).
    w_q = w2d.astype(jnp.bfloat16).astype(jnp.float32)
    s_q = s.astype(jnp.bfloat16).astype(jnp.float32)
    ref_q = jnp.einsum(
        "nchw,oc->nohw", s_q, w_q, precision=jax.lax.Precision.HIGHEST
    )
    assert jnp.allclose(out, ref_q, atol=1e-3, rtol=1e-3)

    # Semantics check: against the full-f32 module reference, at a tolerance
    # appropriate for the deliberate bf16 weight/activation quantization.
    ref_f32 = jnp.einsum(
        "nchw,oc->nohw", s, w2d, precision=jax.lax.Precision.HIGHEST
    )
    assert jnp.allclose(out, ref_f32, atol=2e-2, rtol=2e-2)

    print("KERNEL_OK")
</pallas_src>

<mosaic_0001>
module attributes {stable_mosaic.version = 11 : i64} {
  func.func @add_conv1x1_kernel(%arg0: i32, %arg1: i32, %arg2: memref<688x344xbf16, #tpu.memory_space<vmem>>, %arg3: memref<1x344x49xf32, #tpu.memory_space<vmem>>, %arg4: memref<1x344x49xf32, #tpu.memory_space<vmem>>, %arg5: memref<1x688x49xf32, #tpu.memory_space<vmem>>) attributes {dimension_semantics = [#tpu.dimension_semantics<parallel>, #tpu.dimension_semantics<parallel>], iteration_bounds = array<i64: 1, 3>, scalar_prefetch = 0 : i64, scratch_operands = 0 : i64, tpu.core_type = #tpu.core_type<tc>, window_params = [{transform_indices = @transform_0, window_bounds = array<i64: 688, 344>}, {transform_indices = @transform_1, window_bounds = array<i64: 1, 344, 49>}, {transform_indices = @transform_2, window_bounds = array<i64: 1, 344, 49>}, {transform_indices = @transform_3, window_bounds = array<i64: 1, 688, 49>}]} {
    %c0 = arith.constant 0 : index
    %c0_0 = arith.constant 0 : index
    %c0_1 = arith.constant 0 : index
    %0 = vector.load %arg3[%c0, %c0_0, %c0_1] : memref<1x344x49xf32, #tpu.memory_space<vmem>>, vector<1x344x49xf32>
    %1 = vector.shape_cast %0 : vector<1x344x49xf32> to vector<344x49xf32>
    %c0_2 = arith.constant 0 : index
    %c0_3 = arith.constant 0 : index
    %c0_4 = arith.constant 0 : index
    %2 = vector.load %arg4[%c0_2, %c0_3, %c0_4] : memref<1x344x49xf32, #tpu.memory_space<vmem>>, vector<1x344x49xf32>
    %3 = vector.shape_cast %2 : vector<1x344x49xf32> to vector<344x49xf32>
    %4 = arith.addf %1, %3 : vector<344x49xf32>
    %5 = arith.truncf %4 : vector<344x49xf32> to vector<344x49xbf16>
    %c0_5 = arith.constant 0 : index
    %c0_6 = arith.constant 0 : index
    %6 = vector.load %arg2[%c0_5, %c0_6] : memref<688x344xbf16, #tpu.memory_space<vmem>>, vector<688x344xbf16>
    %cst = arith.constant dense<0.000000e+00> : vector<688x49xf32>
    %7 = tpu.matmul %6, %5, %cst {dimension_numbers = #tpu.dot_dimension_numbers<[1], [0], [0], [1], [0, 0, 1, 1], [], []>} : vector<688x344xbf16>, vector<344x49xbf16>, vector<688x49xf32> -> vector<688x49xf32>
    %c0_7 = arith.constant 0 : index
    %c0_8 = arith.constant 0 : index
    %c0_9 = arith.constant 0 : index
    %8 = vector.load %arg5[%c0_7, %c0_8, %c0_9] : memref<1x688x49xf32, #tpu.memory_space<vmem>>, vector<1x688x49xf32>
    %9 = vector.shape_cast %8 : vector<1x688x49xf32> to vector<688x49xf32>
    %10 = vector.shape_cast %7 : vector<688x49xf32> to vector<1x688x49xf32>
    tpu.vector_store %arg5[%c0_7, %c0_8, %c0_9], %10 {strides = array<i32>} : memref<1x688x49xf32, #tpu.memory_space<vmem>>, vector<1x688x49xf32>,
    return
  }
  func.func @transform_0(%arg0: i32, %arg1: i32) -> (i32, i32) {
    %c0_i32 = arith.constant 0 : i32
    %c0_i32_0 = arith.constant 0 : i32
    return %arg1, %c0_i32 : i32, i32
  }
  func.func @transform_1(%arg0: i32, %arg1: i32) -> (i32, i32, i32) {
    %c0_i32 = arith.constant 0 : i32
    %c0_i32_0 = arith.constant 0 : i32
    %c0_i32_1 = arith.constant 0 : i32
    return %arg0, %c0_i32, %c0_i32_0 : i32, i32, i32
  }
  func.func @transform_2(%arg0: i32, %arg1: i32) -> (i32, i32, i32) {
    %c0_i32 = arith.constant 0 : i32
    %c0_i32_0 = arith.constant 0 : i32
    %c0_i32_1 = arith.constant 0 : i32
    return %arg0, %c0_i32, %c0_i32_0 : i32, i32, i32
  }
  func.func @transform_3(%arg0: i32, %arg1: i32) -> (i32, i32, i32) {
    %c0_i32 = arith.constant 0 : i32
    %c0_i32_0 = arith.constant 0 : i32
    return %arg0, %arg1, %c0_i32 : i32, i32, i32
  }
}

</mosaic_0001>

<llo_original>
// kernel: tpu_custom_call.1
$region0: #{tpu_custom_call.1}
  #allocation0 [shape = 'u32[]', space=smem, size = 0x4, offset = 0x4, fixed_abs, tag = 'smem constant byte address 0x4 - core index']
  #allocation1 [shape = 'u32[144,128]{1,0:T(1,128)}', space=vmem, size = 0x12000, scoped, tag = 'internal scratch']
  %s0 = inlined_call_operand.vmem [shape: bf16[2064,344], index: 0, kind: input, shape index: {}]
  %s1 = inlined_call_operand.vmem [shape: f32[1,344,49], index: 1, kind: input, shape index: {}]
  %s2 = inlined_call_operand.vmem [shape: f32[1,344,49], index: 2, kind: input, shape index: {}]
  %s3 = inlined_call_operand.vmem [shape: f32[1,2064,49], index: 3, kind: output, shape index: {}]
  %s4 = sld [smem:[#allocation0]]
  $region45: #{tpu_custom_call.1} parent=0
    _
  %s6 = ssub.s32 1, %s4
  %s7 = scalar_select 0, %s6, %s4
  loop: start=0, step=1, limit=5
  $region2: #{tpu_custom_call.1} parent=0 // loop_pre_header
    _
  $region3: #{tpu_custom_call.1} parent=0 // loop_header
    %s9 = sphi 0, %s13
    %p10 = scmp.ge.s32.totalorder %s9, 5
    %s16 = sphi 0, %s28
    %s17 = sphi 0, %s24
    %s18 = sphi 0, %s16
    %s19 = sphi 0, %s17
    %s20 = sphi 0, %s18
    %s21 = sphi 0, %s19
    %s31 = sphi 0, %s33
    %s34 = sphi 0, %s31
    %s35 = sphi 0, %s34
    %s51 = sphi 0, %s35
    %s57 = sphi 0, %s59
    %s60 = sphi 0, %s57
    %s61 = sphi 0, %s60
    %s77 = sphi 0, %s61
    %s83 = sphi 0, %s85
    %s86 = sphi 0, %s83
    %s87 = sphi 0, %s86
    %s103 = sphi 0, %s87
    %s111 = sphi 0, %s113
    %s114 = sphi 0, %s111
    %s115 = sphi 0, %s114
    %s131 = sphi 0, %s115
  $region4: #{tpu_custom_call.1} parent=0 // loop_header_branch
    %12 = sbr.rel (%p10) target = $region8
  $region5: #{tpu_custom_call.1} parent=0 // loop_body
    %s14 = ssub.s32 %s9, 1
    %s15 = ssub.s32 %s9, 2
    %s22 = sadd.s32 1, %s17
    %p23 = scmp.ge.s32.totalorder %s22, 3
    %s24 = scalar_select %p23, 0, %s22
    %s25 = sadd.s32 1, %s16
    %s26 = scalar_select %p23, %s25, %s16
    %p27 = scmp.ge.s32.totalorder %s26, 1
    %s28 = scalar_select %p27, 0, %s26
    %s29 = ssub.s32 %s17, %s24
    %p30 = scmp.eq.s32.totalorder %s29, 0
    %s32 = sadd.s32 %s31, 1
    %s33 = scalar_select %p30, %s31, %s32
    %p36 = pneg %p30
    %p37 = scmp.eq.s32.totalorder %s9, 2
    %p38 = por %p36, %p37
    %p39 = scmp.ne.s32.totalorder %s31, %s34
    %p40 = scmp.eq.s32.totalorder %s9, 0
    %p41 = por %p39, %p40
    %p42 = scmp.ne.s32.totalorder %s31, %s34
    %p43 = scmp.eq.s32.totalorder %s14, 2
    %p44 = por %p42, %p43
    %p45 = scmp.ne.s32.totalorder %s34, %s35
    %p46 = scmp.eq.s32.totalorder %s14, 0
    %p47 = por %p45, %p46
    %p48 = scmp.ne.s32.totalorder %s34, %s35
    %p49 = scmp.eq.s32.totalorder %s15, 2
    %p50 = por %p48, %p49
    %p52 = scmp.ne.s32.totalorder %s35, %s51
    %p53 = scmp.eq.s32.totalorder %s15, 0
    %p54 = por %p52, %p53
    %s55 = ssub.s32 %s16, %s28
    %p56 = scmp.eq.s32.totalorder %s55, 0
    %s58 = sadd.s32 %s57, 1
    %s59 = scalar_select %p56, %s57, %s58
    %p62 = pneg %p56
    %p63 = scmp.eq.s32.totalorder %s9, 2
    %p64 = por %p62, %p63
    %p65 = scmp.ne.s32.totalorder %s57, %s60
    %p66 = scmp.eq.s32.totalorder %s9, 0
    %p67 = por %p65, %p66
    %p68 = scmp.ne.s32.totalorder %s57, %s60
    %p69 = scmp.eq.s32.totalorder %s14, 2
    %p70 = por %p68, %p69
    %p71 = scmp.ne.s32.totalorder %s60, %s61
    %p72 = scmp.eq.s32.totalorder %s14, 0
    %p73 = por %p71, %p72
    %p74 = scmp.ne.s32.totalorder %s60, %s61
    %p75 = scmp.eq.s32.totalorder %s15, 2
    %p76 = por %p74, %p75
    %p78 = scmp.ne.s32.totalorder %s61, %s77
    %p79 = scmp.eq.s32.totalorder %s15, 0
    %p80 = por %p78, %p79
    %s81 = ssub.s32 %s16, %s28
    %p82 = scmp.eq.s32.totalorder %s81, 0
    %s84 = sadd.s32 %s83, 1
    %s85 = scalar_select %p82, %s83, %s84
    %p88 = pneg %p82
    %p89 = scmp.eq.s32.totalorder %s9, 2
    %p90 = por %p88, %p89
    %p91 = scmp.ne.s32.totalorder %s83, %s86
    %p92 = scmp.eq.s32.totalorder %s9, 0
    %p93 = por %p91, %p92
    %p94 = scmp.ne.s32.totalorder %s83, %s86
    %p95 = scmp.eq.s32.totalorder %s14, 2
    %p96 = por %p94, %p95
    %p97 = scmp.ne.s32.totalorder %s86, %s87
    %p98 = scmp.eq.s32.totalorder %s14, 0
    %p99 = por %p97, %p98
    %p100 = scmp.ne.s32.totalorder %s86, %s87
    %p101 = scmp.eq.s32.totalorder %s15, 2
    %p102 = por %p100, %p101
    %p104 = scmp.ne.s32.totalorder %s87, %s103
    %p105 = scmp.eq.s32.totalorder %s15, 0
    %p106 = por %p104, %p105
    %s107 = ssub.s32 %s16, %s28
    %s108 = ssub.s32 %s17, %s24
    %s109 = sor.u32 %s107, %s108
    %p110 = scmp.eq.s32.totalorder %s109, 0
    %s112 = sadd.s32 %s111, 1
    %s113 = scalar_select %p110, %s111, %s112
    %p116 = pneg %p110
    %p117 = scmp.eq.s32.totalorder %s9, 2
    %p118 = por %p116, %p117
    %p119 = scmp.ne.s32.totalorder %s111, %s114
    %p120 = scmp.eq.s32.totalorder %s9, 0
    %p121 = por %p119, %p120
    %p122 = scmp.ne.s32.totalorder %s111, %s114
    %p123 = scmp.eq.s32.totalorder %s14, 2
    %p124 = por %p122, %p123
    %p125 = scmp.ne.s32.totalorder %s114, %s115
    %p126 = scmp.eq.s32.totalorder %s14, 0
    %p127 = por %p125, %p126
    %p128 = scmp.ne.s32.totalorder %s114, %s115
    %p129 = scmp.eq.s32.totalorder %s15, 2
    %p130 = por %p128, %p129
    %p132 = scmp.ne.s32.totalorder %s115, %s131
    %p133 = scmp.eq.s32.totalorder %s15, 0
    %p134 = por %p132, %p133
    %p135 = scmp.le.s32.totalorder 1, %s9
    %p136 = scmp.lt.s32.totalorder %s9, 4
    %p137 = pnand %p135, %p136
    %p138 = pneg %p137
    // Predicated region
    $region9: #{tpu_custom_call.1} parent=5 // pred_check
      _
    $region10: #{tpu_custom_call.1} parent=5 // pred_check_branch
      %140 = sbr.rel (%p137) target = $region12
    $region11: #{tpu_custom_call.1} parent=5 // pred_region
      %s141 = ssub.s32 %s9, 1
      // Predicated region
      $region13: #{tpu_custom_call.1} parent=11 // pred_check
        %p142 = pneg %p73
      $region14: #{tpu_custom_call.1} parent=11 // pred_check_branch
        %144 = sbr.rel (%p142) target = $region16
      $region15: #{tpu_custom_call.1} parent=11 // pred_region
        %p145 = scmp.lt.s32.totalorder %s18, 0
        %s146 = scalar_select %p145, %s18, 0
        %s147 = smul.addr %s146, 43
        %s148 = smul.addr %s147, 8
        %s149 = scalar_lea.vmem %s1, %s148
      $region16: #{tpu_custom_call.1} parent=11 // pred_fallthru
        _
      // Predicated region
      $region17: #{tpu_custom_call.1} parent=11 // pred_check
        %p150 = pneg %p99
      $region18: #{tpu_custom_call.1} parent=11 // pred_check_branch
        %152 = sbr.rel (%p150) target = $region20
      $region19: #{tpu_custom_call.1} parent=11 // pred_region
        %p153 = scmp.lt.s32.totalorder %s18, 0
        %s154 = scalar_select %p153, %s18, 0
        %s155 = smul.addr %s154, 43
        %s156 = smul.addr %s155, 8
        %s157 = scalar_lea.vmem %s2, %s156
      $region20: #{tpu_custom_call.1} parent=11 // pred_fallthru
        _
    $region12: #{tpu_custom_call.1} parent=5 // pred_fallthru
      _
    %p158 = scmp.lt.s32.totalorder %s9, 3
    // Predicated region
    $region21: #{tpu_custom_call.1} parent=5 // pred_check
      %p159 = pneg %p158
    $region22: #{tpu_custom_call.1} parent=5 // pred_check_branch
      %161 = sbr.rel (%p159) target = $region24
    $region23: #{tpu_custom_call.1} parent=5 // pred_region
      // Predicated region
      $region25: #{tpu_custom_call.1} parent=23 // pred_check
        %p162 = pneg %p41
      $region26: #{tpu_custom_call.1} parent=23 // pred_check_branch
        %164 = sbr.rel (%p162) target = $region28
      $region27: #{tpu_custom_call.1} parent=23 // pred_region
        %s165 = smul.u32 86, %s17
        %p166 = scmp.lt.s32.totalorder %s165, 257
        %s167 = scalar_select %p166, %s165, 257
        %s168 = smul.addr %s167, 3
        %s169 = smul.addr %s168, 4
        %s170 = scalar_lea.vmem %s0, %s169
        %s171 = smul.u32 86, %s17
      $region28: #{tpu_custom_call.1} parent=23 // pred_fallthru
        _
    $region24: #{tpu_custom_call.1} parent=5 // pred_fallthru
      _
    %p172 = scmp.le.s32.totalorder 1, %s9
    %p173 = scmp.lt.s32.totalorder %s9, 4
    %p174 = pnand %p172, %p173
    %p175 = pneg %p174
    // Predicated region
    $region29: #{tpu_custom_call.1} parent=5 // pred_check
      _
    $region30: #{tpu_custom_call.1} parent=5 // pred_check_branch
      %177 = sbr.rel (%p174) target = $region32
    $region31: #{tpu_custom_call.1} parent=5 // pred_region
      %s178 = ssub.s32 %s9, 1
      %s179 = smul.u32 86, %s19
      %p180 = scmp.lt.s32.totalorder %s179, 257
      %s181 = scalar_select %p180, %s179, 257
      %s182 = smul.addr %s181, 3
      %s183 = smul.addr %s182, 4
      %s184 = scalar_lea.vmem %s0, %s183
      %p185 = pneg %p47
      %p186 = pneg %p44
      %p187 = scmp.lt.s32.totalorder %s18, 0
      %s188 = scalar_select %p187, %s18, 0
      %s189 = smul.addr %s188, 43
      %s190 = smul.addr %s189, 8
      %s191 = scalar_lea.vmem %s1, %s190
      %p192 = pneg %p73
      %p193 = pneg %p70
      %p194 = scmp.lt.s32.totalorder %s18, 0
      %s195 = scalar_select %p194, %s18, 0
      %s196 = smul.addr %s195, 43
      %s197 = smul.addr %s196, 8
      %s198 = scalar_lea.vmem %s2, %s197
      %p199 = pneg %p99
      %p200 = pneg %p96
      %p201 = pneg %p127
      %p202 = pneg %p124
      %s203 = smul.u32 86, %s19
      %p204 = scmp.lt.s32.totalorder %s18, 0
      %s205 = scalar_select %p204, %s18, 0
      %p206 = scmp.lt.s32.totalorder %s203, 257
      %s207 = scalar_select %p206, %s203, 257
      %s208 = smul.addr %s205, 258
      %s209 = sadd.s32 %s207, %s208
      %s210 = smul.addr %s209, 8
      %s211 = scalar_lea.vmem %s3, %s210
      %s212 = smul.u32 86, %s19
      %p213 = scmp.lt.s32.totalorder %s212, 257
      %s214 = scalar_select %p213, %s212, 257
      %s215 = smul.addr %s214, 3
      %s216 = smul.addr %s215, 4
      %s217 = scalar_lea.vmem %s0, %s216
      %s218 = smul.u32 86, %s19
      %p219 = scmp.lt.s32.totalorder %s18, 0
      %s220 = scalar_select %p219, %s18, 0
      %s221 = smul.addr %s220, 43
      %s222 = smul.addr %s221, 8
      %s223 = scalar_lea.vmem %s1, %s222
      %p224 = scmp.lt.s32.totalorder %s18, 0
      %s225 = scalar_select %p224, %s18, 0
      %s226 = smul.addr %s225, 43
      %s227 = smul.addr %s226, 8
      %s228 = scalar_lea.vmem %s2, %s227
      %s229 = smul.u32 86, %s19
      %p230 = scmp.lt.s32.totalorder %s18, 0
      %s231 = scalar_select %p230, %s18, 0
      %p232 = scmp.lt.s32.totalorder %s229, 257
      %s233 = scalar_select %p232, %s229, 257
      %s234 = smul.addr %s231, 258
      %s235 = sadd.s32 %s233, %s234
      %s236 = smul.addr %s235, 8
      %s237 = scalar_lea.vmem %s3, %s236
      %s238 = smul.u32 86, %s19
      %v240 = vld [vmem:[%s223] sm:$0xff]
      %v241 = vld [vmem:[%s223 + $0x8] sm:$0xff]
      %v242 = vld [vmem:[%s223 + $0x10] sm:$0xff]
      %v243 = vld [vmem:[%s223 + $0x18] sm:$0xff]
      %v244 = vld [vmem:[%s223 + $0x20] sm:$0xff]
      %v245 = vld [vmem:[%s223 + $0x28] sm:$0xff]
      %v246 = vld [vmem:[%s223 + $0x30] sm:$0xff]
      %v247 = vld [vmem:[%s223 + $0x38] sm:$0xff]
      %v248 = vld [vmem:[%s223 + $0x40] sm:$0xff]
      %v249 = vld [vmem:[%s223 + $0x48] sm:$0xff]
      %v250 = vld [vmem:[%s223 + $0x50] sm:$0xff]
      %v251 = vld [vmem:[%s223 + $0x58] sm:$0xff]
      %v252 = vld [vmem:[%s223 + $0x60] sm:$0xff]
      %v253 = vld [vmem:[%s223 + $0x68] sm:$0xff]
      %v254 = vld [vmem:[%s223 + $0x70] sm:$0xff]
      %v255 = vld [vmem:[%s223 + $0x78] sm:$0xff]
      %v256 = vld [vmem:[%s223 + $0x80] sm:$0xff]
      %v257 = vld [vmem:[%s223 + $0x88] sm:$0xff]
      %v258 = vld [vmem:[%s223 + $0x90] sm:$0xff]
      %v259 = vld [vmem:[%s223 + $0x98] sm:$0xff]
      %v260 = vld [vmem:[%s223 + $0xa0] sm:$0xff]
      %v261 = vld [vmem:[%s223 + $0xa8] sm:$0xff]
      %v262 = vld [vmem:[%s223 + $0xb0] sm:$0xff]
      %v263 = vld [vmem:[%s223 + $0xb8] sm:$0xff]
      %v264 = vld [vmem:[%s223 + $0xc0] sm:$0xff]
      %v265 = vld [vmem:[%s223 + $0xc8] sm:$0xff]
      %v266 = vld [vmem:[%s223 + $0xd0] sm:$0xff]
      %v267 = vld [vmem:[%s223 + $0xd8] sm:$0xff]
      %v268 = vld [vmem:[%s223 + $0xe0] sm:$0xff]
      %v269 = vld [vmem:[%s223 + $0xe8] sm:$0xff]
      %v270 = vld [vmem:[%s223 + $0xf0] sm:$0xff]
      %v271 = vld [vmem:[%s223 + $0xf8] sm:$0xff]
      %v272 = vld [vmem:[%s223 + $0x100] sm:$0xff]
      %v273 = vld [vmem:[%s223 + $0x108] sm:$0xff]
      %v274 = vld [vmem:[%s223 + $0x110] sm:$0xff]
      %v275 = vld [vmem:[%s223 + $0x118] sm:$0xff]
      %v276 = vld [vmem:[%s223 + $0x120] sm:$0xff]
      %v277 = vld [vmem:[%s223 + $0x128] sm:$0xff]
      %v278 = vld [vmem:[%s223 + $0x130] sm:$0xff]
      %v279 = vld [vmem:[%s223 + $0x138] sm:$0xff]
      %v280 = vld [vmem:[%s223 + $0x140] sm:$0xff]
      %v281 = vld [vmem:[%s223 + $0x148] sm:$0xff]
      %v282 = vld [vmem:[%s223 + $0x150] sm:$0xff]
      %v283 = vld [vmem:[%s228] sm:$0xff]
      %v284 = vld [vmem:[%s228 + $0x8] sm:$0xff]
      %v285 = vld [vmem:[%s228 + $0x10] sm:$0xff]
      %v286 = vld [vmem:[%s228 + $0x18] sm:$0xff]
      %v287 = vld [vmem:[%s228 + $0x20] sm:$0xff]
      %v288 = vld [vmem:[%s228 + $0x28] sm:$0xff]
      %v289 = vld [vmem:[%s228 + $0x30] sm:$0xff]
      %v290 = vld [vmem:[%s228 + $0x38] sm:$0xff]
      %v291 = vld [vmem:[%s228 + $0x40] sm:$0xff]
      %v292 = vld [vmem:[%s228 + $0x48] sm:$0xff]
      %v293 = vld [vmem:[%s228 + $0x50] sm:$0xff]
      %v294 = vld [vmem:[%s228 + $0x58] sm:$0xff]
      %v295 = vld [vmem:[%s228 + $0x60] sm:$0xff]
      %v296 = vld [vmem:[%s228 + $0x68] sm:$0xff]
      %v297 = vld [vmem:[%s228 + $0x70] sm:$0xff]
      %v298 = vld [vmem:[%s228 + $0x78] sm:$0xff]
      %v299 = vld [vmem:[%s228 + $0x80] sm:$0xff]
      %v300 = vld [vmem:[%s228 + $0x88] sm:$0xff]
      %v301 = vld [vmem:[%s228 + $0x90] sm:$0xff]
      %v302 = vld [vmem:[%s228 + $0x98] sm:$0xff]
      %v303 = vld [vmem:[%s228 + $0xa0] sm:$0xff]
      %v304 = vld [vmem:[%s228 + $0xa8] sm:$0xff]
      %v305 = vld [vmem:[%s228 + $0xb0] sm:$0xff]
      %v306 = vld [vmem:[%s228 + $0xb8] sm:$0xff]
      %v307 = vld [vmem:[%s228 + $0xc0] sm:$0xff]
      %v308 = vld [vmem:[%s228 + $0xc8] sm:$0xff]
      %v309 = vld [vmem:[%s228 + $0xd0] sm:$0xff]
      %v310 = vld [vmem:[%s228 + $0xd8] sm:$0xff]
      %v311 = vld [vmem:[%s228 + $0xe0] sm:$0xff]
      %v312 = vld [vmem:[%s228 + $0xe8] sm:$0xff]
      %v313 = vld [vmem:[%s228 + $0xf0] sm:$0xff]
      %v314 = vld [vmem:[%s228 + $0xf8] sm:$0xff]
      %v315 = vld [vmem:[%s228 + $0x100] sm:$0xff]
      %v316 = vld [vmem:[%s228 + $0x108] sm:$0xff]
      %v317 = vld [vmem:[%s228 + $0x110] sm:$0xff]
      %v318 = vld [vmem:[%s228 + $0x118] sm:$0xff]
      %v319 = vld [vmem:[%s228 + $0x120] sm:$0xff]
      %v320 = vld [vmem:[%s228 + $0x128] sm:$0xff]
      %v321 = vld [vmem:[%s228 + $0x130] sm:$0xff]
      %v322 = vld [vmem:[%s228 + $0x138] sm:$0xff]
      %v323 = vld [vmem:[%s228 + $0x140] sm:$0xff]
      %v324 = vld [vmem:[%s228 + $0x148] sm:$0xff]
      %v325 = vld [vmem:[%s228 + $0x150] sm:$0xff]
      %v326 = vadd.f32 %v240, %v283
      %v327 = vadd.f32 %v241, %v284
      %v328 = vadd.f32 %v242, %v285
      %v329 = vadd.f32 %v243, %v286
      %v330 = vadd.f32 %v244, %v287
      %v331 = vadd.f32 %v245, %v288
      %v332 = vadd.f32 %v246, %v289
      %v333 = vadd.f32 %v247, %v290
      %v334 = vadd.f32 %v248, %v291
      %v335 = vadd.f32 %v249, %v292
      %v336 = vadd.f32 %v250, %v293
      %v337 = vadd.f32 %v251, %v294
      %v338 = vadd.f32 %v252, %v295
      %v339 = vadd.f32 %v253, %v296
      %v340 = vadd.f32 %v254, %v297
      %v341 = vadd.f32 %v255, %v298
      %v342 = vadd.f32 %v256, %v299
      %v343 = vadd.f32 %v257, %v300
      %v344 = vadd.f32 %v258, %v301
      %v345 = vadd.f32 %v259, %v302
      %v346 = vadd.f32 %v260, %v303
      %v347 = vadd.f32 %v261, %v304
      %v348 = vadd.f32 %v262, %v305
      %v349 = vadd.f32 %v263, %v306
      %v350 = vadd.f32 %v264, %v307
      %v351 = vadd.f32 %v265, %v308
      %v352 = vadd.f32 %v266, %v309
      %v353 = vadd.f32 %v267, %v310
      %v354 = vadd.f32 %v268, %v311
      %v355 = vadd.f32 %v269, %v312
      %v356 = vadd.f32 %v270, %v313
      %v357 = vadd.f32 %v271, %v314
      %v358 = vadd.f32 %v272, %v315
      %v359 = vadd.f32 %v273, %v316
      %v360 = vadd.f32 %v274, %v317
      %v361 = vadd.f32 %v275, %v318
      %v362 = vadd.f32 %v276, %v319
      %v363 = vadd.f32 %v277, %v320
      %v364 = vadd.f32 %v278, %v321
      %v365 = vadd.f32 %v279, %v322
      %v366 = vadd.f32 %v280, %v323
      %v367 = vadd.f32 %v281, %v324
      %v368 = vadd.f32 %v282, %v325
      %v369 = vpack.c.bf16 %v327, %v326
      %v370 = vpack.c.bf16 %v329, %v328
      %v371 = vpack.c.bf16 %v331, %v330
      %v372 = vpack.c.bf16 %v333, %v332
      %v373 = vpack.c.bf16 %v335, %v334
      %v374 = vpack.c.bf16 %v337, %v336
      %v375 = vpack.c.bf16 %v339, %v338
      %v376 = vpack.c.bf16 %v341, %v340
      %v377 = vpack.c.bf16 %v343, %v342
      %v378 = vpack.c.bf16 %v345, %v344
      %v379 = vpack.c.bf16 %v347, %v346
      %v380 = vpack.c.bf16 %v349, %v348
      %v381 = vpack.c.bf16 %v351, %v350
      %v382 = vpack.c.bf16 %v353, %v352
      %v383 = vpack.c.bf16 %v355, %v354
      %v384 = vpack.c.bf16 %v357, %v356
      %v385 = vpack.c.bf16 %v359, %v358
      %v386 = vpack.c.bf16 %v361, %v360
      %v387 = vpack.c.bf16 %v363, %v362
      %v388 = vpack.c.bf16 %v365, %v364
      %v389 = vpack.c.bf16 %v367, %v366
      %v390 = vpack.c.bf16 %v368, %v368
      %v391 = vld [vmem:[%s217] sm:$0xff]
      %v392 = vld [vmem:[%s217 + $0x8] sm:$0xf]
      %v393 = vld [vmem:[%s217 + $0xc] sm:$0xff]
      %v394 = vld [vmem:[%s217 + $0x14] sm:$0xf]
      %v395 = vld [vmem:[%s217 + $0x18] sm:$0xff]
      %v396 = vld [vmem:[%s217 + $0x20] sm:$0xf]
      %v397 = vld [vmem:[%s217 + $0x24] sm:$0xff]
      %v398 = vld [vmem:[%s217 + $0x2c] sm:$0xf]
      %v399 = vld [vmem:[%s217 + $0x30] sm:$0xff]
      %v400 = vld [vmem:[%s217 + $0x38] sm:$0xf]
      %v401 = vld [vmem:[%s217 + $0x3c] sm:$0xff]
      %v402 = vld [vmem:[%s217 + $0x44] sm:$0xf]
      %v403 = vld [vmem:[%s217 + $0x48] sm:$0xff]
      %v404 = vld [vmem:[%s217 + $0x50] sm:$0xf]
      %v405 = vld [vmem:[%s217 + $0x54] sm:$0xff]
      %v406 = vld [vmem:[%s217 + $0x5c] sm:$0xf]
      %v407 = vld [vmem:[%s217 + $0x60] sm:$0xff]
      %v408 = vld [vmem:[%s217 + $0x68] sm:$0xf]
      %v409 = vld [vmem:[%s217 + $0x6c] sm:$0xff]
      %v410 = vld [vmem:[%s217 + $0x74] sm:$0xf]
      %v411 = vld [vmem:[%s217 + $0x78] sm:$0xff]
      %v412 = vld [vmem:[%s217 + $0x80] sm:$0xf]
      %v413 = vld [vmem:[%s217 + $0x84] sm:$0xff]
      %v414 = vld [vmem:[%s217 + $0x8c] sm:$0xf]
      %v415 = vld [vmem:[%s217 + $0x90] sm:$0xff]
      %v416 = vld [vmem:[%s217 + $0x98] sm:$0xf]
      %v417 = vld [vmem:[%s217 + $0x9c] sm:$0xff]
      %v418 = vld [vmem:[%s217 + $0xa4] sm:$0xf]
      %v419 = vld [vmem:[%s217 + $0xa8] sm:$0xff]
      %v420 = vld [vmem:[%s217 + $0xb0] sm:$0xf]
      %v421 = vld [vmem:[%s217 + $0xb4] sm:$0xff]
      %v422 = vld [vmem:[%s217 + $0xbc] sm:$0xf]
      %v423 = vld [vmem:[%s217 + $0xc0] sm:$0xff]
      %v424 = vld [vmem:[%s217 + $0xc8] sm:$0xf]
      %v425 = vld [vmem:[%s217 + $0xcc] sm:$0xff]
      %v426 = vld [vmem:[%s217 + $0xd4] sm:$0xf]
      %v427 = vld [vmem:[%s217 + $0xd8] sm:$0xff]
      %v428 = vld [vmem:[%s217 + $0xe0] sm:$0xf]
      %v429 = vld [vmem:[%s217 + $0xe4] sm:$0xff]
      %v430 = vld [vmem:[%s217 + $0xec] sm:$0xf]
      %v431 = vld [vmem:[%s217 + $0xf0] sm:$0xff]
      %v432 = vld [vmem:[%s217 + $0xf8] sm:$0xf]
      %v433 = vld [vmem:[%s217 + $0xfc] sm:$0xff]
      %v434 = vld [vmem:[%s217 + $0x104] sm:$0xf]
      %v435 = vld [vmem:[%s217 + $0x108] sm:$0xff]
      %v436 = vld [vmem:[%s217 + $0x110] sm:$0xf]
      %v437 = vld [vmem:[%s217 + $0x114] sm:$0xff]
      %v438 = vld [vmem:[%s217 + $0x11c] sm:$0xf]
      %v439 = vld [vmem:[%s217 + $0x120] sm:$0xff]
      %v440 = vld [vmem:[%s217 + $0x128] sm:$0xf]
      %v441 = vld [vmem:[%s217 + $0x12c] sm:$0xff]
      %v442 = vld [vmem:[%s217 + $0x134] sm:$0xf]
      %v443 = vld [vmem:[%s217 + $0x138] sm:$0xff]
      %v444 = vld [vmem:[%s217 + $0x140] sm:$0xf]
      %v445 = vld [vmem:[%s217 + $0x144] sm:$0xff]
      %v446 = vld [vmem:[%s217 + $0x14c] sm:$0xf]
      %v447 = vld [vmem:[%s217 + $0x150] sm:$0xff]
      %v448 = vld [vmem:[%s217 + $0x158] sm:$0xf]
      %v449 = vld [vmem:[%s217 + $0x15c] sm:$0xff]
      %v450 = vld [vmem:[%s217 + $0x164] sm:$0xf]
      %v451 = vld [vmem:[%s217 + $0x168] sm:$0xff]
      %v452 = vld [vmem:[%s217 + $0x170] sm:$0xf]
      %v453 = vld [vmem:[%s217 + $0x174] sm:$0xff]
      %v454 = vld [vmem:[%s217 + $0x17c] sm:$0xf]
      %v455 = vld [vmem:[%s217 + $0x180] sm:$0xff]
      %v456 = vld [vmem:[%s217 + $0x188] sm:$0xf]
      %v457 = vld [vmem:[%s217 + $0x18c] sm:$0xff]
      %v458 = vld [vmem:[%s217 + $0x194] sm:$0xf]
      %v459 = vld [vmem:[%s217 + $0x198] sm:$0xff]
      %v460 = vld [vmem:[%s217 + $0x1a0] sm:$0xf]
      %v461 = vld [vmem:[%s217 + $0x1a4] sm:$0xff]
      %v462 = vld [vmem:[%s217 + $0x1ac] sm:$0xf]
      %v463 = vld [vmem:[%s217 + $0x1b0] sm:$0xff]
      %v464 = vld [vmem:[%s217 + $0x1b8] sm:$0xf]
      %v465 = vld [vmem:[%s217 + $0x1bc] sm:$0xff]
      %v466 = vld [vmem:[%s217 + $0x1c4] sm:$0xf]
      %v467 = vld [vmem:[%s217 + $0x1c8] sm:$0xff]
      %v468 = vld [vmem:[%s217 + $0x1d0] sm:$0xf]
      %v469 = vld [vmem:[%s217 + $0x1d4] sm:$0xff]
      %v470 = vld [vmem:[%s217 + $0x1dc] sm:$0xf]
      %v471 = vld [vmem:[%s217 + $0x1e0] sm:$0xff]
      %v472 = vld [vmem:[%s217 + $0x1e8] sm:$0xf]
      %v473 = vld [vmem:[%s217 + $0x1ec] sm:$0xff]
      %v474 = vld [vmem:[%s217 + $0x1f4] sm:$0xf]
      %v475 = vld [vmem:[%s217 + $0x1f8] sm:$0xff]
      %v476 = vld [vmem:[%s217 + $0x200] sm:$0xf]
      %v477 = vld [vmem:[%s217 + $0x204] sm:$0xff]
      %v478 = vld [vmem:[%s217 + $0x20c] sm:$0xf]
      %v479 = vld [vmem:[%s217 + $0x210] sm:$0xff]
      %v480 = vld [vmem:[%s217 + $0x218] sm:$0xf]
      %v481 = vld [vmem:[%s217 + $0x21c] sm:$0xff]
      %v482 = vld [vmem:[%s217 + $0x224] sm:$0xf]
      %v483 = vld [vmem:[%s217 + $0x228] sm:$0xff]
      %v484 = vld [vmem:[%s217 + $0x230] sm:$0xf]
      %v485 = vld [vmem:[%s217 + $0x234] sm:$0xff]
      %v486 = vld [vmem:[%s217 + $0x23c] sm:$0xf]
      %v487 = vld [vmem:[%s217 + $0x240] sm:$0xff]
      %v488 = vld [vmem:[%s217 + $0x248] sm:$0xf]
      %v489 = vld [vmem:[%s217 + $0x24c] sm:$0xff]
      %v490 = vld [vmem:[%s217 + $0x254] sm:$0xf]
      %v491 = vld [vmem:[%s217 + $0x258] sm:$0xff]
      %v492 = vld [vmem:[%s217 + $0x260] sm:$0xf]
      %v493 = vld [vmem:[%s217 + $0x264] sm:$0xff]
      %v494 = vld [vmem:[%s217 + $0x26c] sm:$0xf]
      %v495 = vld [vmem:[%s217 + $0x270] sm:$0xff]
      %v496 = vld [vmem:[%s217 + $0x278] sm:$0xf]
      %v497 = vld [vmem:[%s217 + $0x27c] sm:$0xff]
      %v498 = vld [vmem:[%s217 + $0x284] sm:$0xf]
      %v499 = vld [vmem:[%s217 + $0x288] sm:$0xff]
      %v500 = vld [vmem:[%s217 + $0x290] sm:$0xf]
      %v501 = vld [vmem:[%s217 + $0x294] sm:$0xff]
      %v502 = vld [vmem:[%s217 + $0x29c] sm:$0xf]
      %v503 = vld [vmem:[%s217 + $0x2a0] sm:$0xff]
      %v504 = vld [vmem:[%s217 + $0x2a8] sm:$0xf]
      %v505 = vld [vmem:[%s217 + $0x2ac] sm:$0xff]
      %v506 = vld [vmem:[%s217 + $0x2b4] sm:$0xf]
      %v507 = vld [vmem:[%s217 + $0x2b8] sm:$0xff]
      %v508 = vld [vmem:[%s217 + $0x2c0] sm:$0xf]
      %v509 = vld [vmem:[%s217 + $0x2c4] sm:$0xff]
      %v510 = vld [vmem:[%s217 + $0x2cc] sm:$0xf]
      %v511 = vld [vmem:[%s217 + $0x2d0] sm:$0xff]
      %v512 = vld [vmem:[%s217 + $0x2d8] sm:$0xf]
      %v513 = vld [vmem:[%s217 + $0x2dc] sm:$0xff]
      %v514 = vld [vmem:[%s217 + $0x2e4] sm:$0xf]
      %v515 = vld [vmem:[%s217 + $0x2e8] sm:$0xff]
      %v516 = vld [vmem:[%s217 + $0x2f0] sm:$0xf]
      %v517 = vld [vmem:[%s217 + $0x2f4] sm:$0xff]
      %v518 = vld [vmem:[%s217 + $0x2fc] sm:$0xf]
      %v519 = vld [vmem:[%s217 + $0x300] sm:$0xff]
      %v520 = vld [vmem:[%s217 + $0x308] sm:$0xf]
      %v521 = vld [vmem:[%s217 + $0x30c] sm:$0xff]
      %v522 = vld [vmem:[%s217 + $0x314] sm:$0xf]
      %v523 = vld [vmem:[%s217 + $0x318] sm:$0xff]
      %v524 = vld [vmem:[%s217 + $0x320] sm:$0xf]
      %v525 = vld [vmem:[%s217 + $0x324] sm:$0xff]
      %v526 = vld [vmem:[%s217 + $0x32c] sm:$0xf]
      %v527 = vld [vmem:[%s217 + $0x330] sm:$0xff]
      %v528 = vld [vmem:[%s217 + $0x338] sm:$0xf]
      %v529 = vld [vmem:[%s217 + $0x33c] sm:$0xff]
      %v530 = vld [vmem:[%s217 + $0x344] sm:$0xf]
      %v531 = vld [vmem:[%s217 + $0x348] sm:$0xff]
      %v532 = vld [vmem:[%s217 + $0x350] sm:$0xf]
      %v533 = vld [vmem:[%s217 + $0x354] sm:$0xff]
      %v534 = vld [vmem:[%s217 + $0x35c] sm:$0xf]
      %v535 = vld [vmem:[%s217 + $0x360] sm:$0xff]
      %v536 = vld [vmem:[%s217 + $0x368] sm:$0xf]
      %v537 = vld [vmem:[%s217 + $0x36c] sm:$0xff]
      %v538 = vld [vmem:[%s217 + $0x374] sm:$0xf]
      %v539 = vld [vmem:[%s217 + $0x378] sm:$0xff]
      %v540 = vld [vmem:[%s217 + $0x380] sm:$0xf]
      %v541 = vld [vmem:[%s217 + $0x384] sm:$0xff]
      %v542 = vld [vmem:[%s217 + $0x38c] sm:$0xf]
      %v543 = vld [vmem:[%s217 + $0x390] sm:$0xff]
      %v544 = vld [vmem:[%s217 + $0x398] sm:$0xf]
      %v545 = vld [vmem:[%s217 + $0x39c] sm:$0xff]
      %v546 = vld [vmem:[%s217 + $0x3a4] sm:$0xf]
      %v547 = vld [vmem:[%s217 + $0x3a8] sm:$0xff]
      %v548 = vld [vmem:[%s217 + $0x3b0] sm:$0xf]
      %v549 = vld [vmem:[%s217 + $0x3b4] sm:$0xff]
      %v550 = vld [vmem:[%s217 + $0x3bc] sm:$0xf]
      %v551 = vld [vmem:[%s217 + $0x3c0] sm:$0xff]
      %v552 = vld [vmem:[%s217 + $0x3c8] sm:$0xf]
      %v553 = vld [vmem:[%s217 + $0x3cc] sm:$0xff]
      %v554 = vld [vmem:[%s217 + $0x3d4] sm:$0xf]
      %v555 = vld [vmem:[%s217 + $0x3d8] sm:$0xff]
      %v556 = vld [vmem:[%s217 + $0x3e0] sm:$0xf]
      %v557 = vld [vmem:[%s217 + $0x3e4] sm:$0xff]
      %v558 = vld [vmem:[%s217 + $0x3ec] sm:$0xf]
      %v559 = vld [vmem:[%s217 + $0x3f0] sm:$0xff]
      %v560 = vld [vmem:[%s217 + $0x3f8] sm:$0xf]
      %v561 = vld [vmem:[%s217 + $0x3fc] sm:$0xff]
      %v562 = vld [vmem:[%s217 + $0x404] sm:$0xf]
      %v735 = vunpack.c.l.b16 %v391
      %v736 = vunpack.c.h.b16 %v391
      %v737 = vunpack.c.l.b16 %v392
      %v738 = vunpack.c.l.b16 %v393
      %v739 = vunpack.c.h.b16 %v393
      %v740 = vunpack.c.l.b16 %v394
      %v741 = vunpack.c.l.b16 %v395
      %v742 = vunpack.c.h.b16 %v395
      %v743 = vunpack.c.l.b16 %v396
      %v744 = vunpack.c.l.b16 %v397
      %v745 = vunpack.c.h.b16 %v397
      %v746 = vunpack.c.l.b16 %v398
      %v747 = vunpack.c.l.b16 %v399
      %v748 = vunpack.c.h.b16 %v399
      %v749 = vunpack.c.l.b16 %v400
      %v750 = vunpack.c.l.b16 %v401
      %v751 = vunpack.c.h.b16 %v401
      %v752 = vunpack.c.l.b16 %v402
      %v753 = vunpack.c.l.b16 %v403
      %v754 = vunpack.c.h.b16 %v403
      %v755 = vunpack.c.l.b16 %v404
      %v756 = vunpack.c.l.b16 %v405
      %v757 = vunpack.c.h.b16 %v405
      %v758 = vunpack.c.l.b16 %v406
      %v759 = vunpack.c.l.b16 %v407
      %v760 = vunpack.c.h.b16 %v407
      %v761 = vunpack.c.l.b16 %v408
      %v762 = vunpack.c.l.b16 %v409
      %v763 = vunpack.c.h.b16 %v409
      %v764 = vunpack.c.l.b16 %v410
      %v765 = vunpack.c.l.b16 %v411
      %v766 = vunpack.c.h.b16 %v411
      %v767 = vunpack.c.l.b16 %v412
      %v768 = vunpack.c.l.b16 %v413
      %v769 = vunpack.c.h.b16 %v413
      %v770 = vunpack.c.l.b16 %v414
      %v771 = vunpack.c.l.b16 %v415
      %v772 = vunpack.c.h.b16 %v415
      %v773 = vunpack.c.l.b16 %v416
      %v774 = vunpack.c.l.b16 %v417
      %v775 = vunpack.c.h.b16 %v417
      %v776 = vunpack.c.l.b16 %v418
      %v777 = vunpack.c.l.b16 %v419
      %v778 = vunpack.c.h.b16 %v419
      %v779 = vunpack.c.l.b16 %v420
      %v780 = vunpack.c.l.b16 %v421
      %v781 = vunpack.c.h.b16 %v421
      %v782 = vunpack.c.l.b16 %v422
      %v783 = vunpack.c.l.b16 %v423
      %v784 = vunpack.c.h.b16 %v423
      %v785 = vunpack.c.l.b16 %v424
      %v786 = vunpack.c.l.b16 %v425
      %v787 = vunpack.c.h.b16 %v425
      %v788 = vunpack.c.l.b16 %v426
      %v789 = vunpack.c.l.b16 %v427
      %v790 = vunpack.c.h.b16 %v427
      %v791 = vunpack.c.l.b16 %v428
      %v792 = vunpack.c.l.b16 %v429
      %v793 = vunpack.c.h.b16 %v429
      %v794 = vunpack.c.l.b16 %v430
      %v795 = vunpack.c.l.b16 %v431
      %v796 = vunpack.c.h.b16 %v431
      %v797 = vunpack.c.l.b16 %v432
      %v798 = vunpack.c.l.b16 %v433
      %v799 = vunpack.c.h.b16 %v433
      %v800 = vunpack.c.l.b16 %v434
      %v801 = vunpack.c.l.b16 %v435
      %v802 = vunpack.c.h.b16 %v435
      %v803 = vunpack.c.l.b16 %v436
      %v804 = vunpack.c.l.b16 %v437
      %v805 = vunpack.c.h.b16 %v437
      %v806 = vunpack.c.l.b16 %v438
      %v807 = vunpack.c.l.b16 %v439
      %v808 = vunpack.c.h.b16 %v439
      %v809 = vunpack.c.l.b16 %v440
      %v810 = vunpack.c.l.b16 %v441
      %v811 = vunpack.c.h.b16 %v441
      %v812 = vunpack.c.l.b16 %v442
      %v813 = vunpack.c.l.b16 %v443
      %v814 = vunpack.c.h.b16 %v443
      %v815 = vunpack.c.l.b16 %v444
      %v816 = vunpack.c.l.b16 %v445
      %v817 = vunpack.c.h.b16 %v445
      %v818 = vunpack.c.l.b16 %v446
      %v819 = vunpack.c.l.b16 %v447
      %v820 = vunpack.c.h.b16 %v447
      %v821 = vunpack.c.l.b16 %v448
      %v822 = vunpack.c.l.b16 %v449
      %v823 = vunpack.c.h.b16 %v449
      %v824 = vunpack.c.l.b16 %v450
      %v825 = vunpack.c.l.b16 %v451
      %v826 = vunpack.c.h.b16 %v451
      %v827 = vunpack.c.l.b16 %v452
      %v828 = vunpack.c.l.b16 %v453
      %v829 = vunpack.c.h.b16 %v453
      %v830 = vunpack.c.l.b16 %v454
      %v831 = vunpack.c.l.b16 %v455
      %v832 = vunpack.c.h.b16 %v455
      %v833 = vunpack.c.l.b16 %v456
      %v834 = vunpack.c.l.b16 %v457
      %v835 = vunpack.c.h.b16 %v457
      %v836 = vunpack.c.l.b16 %v458
      %v837 = vunpack.c.l.b16 %v459
      %v838 = vunpack.c.h.b16 %v459
      %v839 = vunpack.c.l.b16 %v460
      %v840 = vunpack.c.l.b16 %v461
      %v841 = vunpack.c.h.b16 %v461
      %v842 = vunpack.c.l.b16 %v462
      %v843 = vunpack.c.l.b16 %v463
      %v844 = vunpack.c.h.b16 %v463
      %v845 = vunpack.c.l.b16 %v464
      %v846 = vunpack.c.l.b16 %v465
      %v847 = vunpack.c.h.b16 %v465
      %v848 = vunpack.c.l.b16 %v466
      %v849 = vunpack.c.l.b16 %v467
      %v850 = vunpack.c.h.b16 %v467
      %v851 = vunpack.c.l.b16 %v468
      %v852 = vunpack.c.l.b16 %v469
      %v853 = vunpack.c.h.b16 %v469
      %v854 = vunpack.c.l.b16 %v470
      %v855 = vunpack.c.l.b16 %v471
      %v856 = vunpack.c.h.b16 %v471
      %v857 = vunpack.c.l.b16 %v472
      %v858 = vunpack.c.l.b16 %v473
      %v859 = vunpack.c.h.b16 %v473
      %v860 = vunpack.c.l.b16 %v474
      %v861 = vunpack.c.l.b16 %v475
      %v862 = vunpack.c.h.b16 %v475
      %v863 = vunpack.c.l.b16 %v476
      %v864 = vunpack.c.l.b16 %v477
      %v865 = vunpack.c.h.b16 %v477
      %v866 = vunpack.c.l.b16 %v478
      %v867 = vunpack.c.l.b16 %v479
      %v868 = vunpack.c.h.b16 %v479
      %v869 = vunpack.c.l.b16 %v480
      %v870 = vunpack.c.l.b16 %v481
      %v871 = vunpack.c.h.b16 %v481
      %v872 = vunpack.c.l.b16 %v482
      %v873 = vunpack.c.l.b16 %v483
      %v874 = vunpack.c.h.b16 %v483
      %v875 = vunpack.c.l.b16 %v484
      %v876 = vunpack.c.l.b16 %v485
      %v877 = vunpack.c.h.b16 %v485
      %v878 = vunpack.c.l.b16 %v486
      %v879 = vunpack.c.l.b16 %v487
      %v880 = vunpack.c.h.b16 %v487
      %v881 = vunpack.c.l.b16 %v488
      %v882 = vunpack.c.l.b16 %v489
      %v883 = vunpack.c.h.b16 %v489
      %v884 = vunpack.c.l.b16 %v490
      %v885 = vunpack.c.l.b16 %v491
      %v886 = vunpack.c.h.b16 %v491
      %v887 = vunpack.c.l.b16 %v492
      %v888 = vunpack.c.l.b16 %v493
      %v889 = vunpack.c.h.b16 %v493
      %v890 = vunpack.c.l.b16 %v494
      %v891 = vunpack.c.l.b16 %v495
      %v892 = vunpack.c.h.b16 %v495
      %v893 = vunpack.c.l.b16 %v496
      %v894 = vunpack.c.l.b16 %v497
      %v895 = vunpack.c.h.b16 %v497
      %v896 = vunpack.c.l.b16 %v498
      %v897 = vunpack.c.l.b16 %v499
      %v898 = vunpack.c.h.b16 %v499
      %v899 = vunpack.c.l.b16 %v500
      %v900 = vunpack.c.l.b16 %v501
      %v901 = vunpack.c.h.b16 %v501
      %v902 = vunpack.c.l.b16 %v502
      %v903 = vunpack.c.l.b16 %v503
      %v904 = vunpack.c.h.b16 %v503
      %v905 = vunpack.c.l.b16 %v504
      %v906 = vunpack.c.l.b16 %v505
      %v907 = vunpack.c.h.b16 %v505
      %v908 = vunpack.c.l.b16 %v506
      %v909 = vunpack.c.l.b16 %v507
      %v910 = vunpack.c.h.b16 %v507
      %v911 = vunpack.c.l.b16 %v508
      %v912 = vunpack.c.l.b16 %v509
      %v913 = vunpack.c.h.b16 %v509
      %v914 = vunpack.c.l.b16 %v510
      %v915 = vunpack.c.l.b16 %v511
      %v916 = vunpack.c.h.b16 %v511
      %v917 = vunpack.c.l.b16 %v512
      %v918 = vunpack.c.l.b16 %v513
      %v919 = vunpack.c.h.b16 %v513
      %v920 = vunpack.c.l.b16 %v514
      %v921 = vunpack.c.l.b16 %v515
      %v922 = vunpack.c.h.b16 %v515
      %v923 = vunpack.c.l.b16 %v516
      %v924 = vunpack.c.l.b16 %v517
      %v925 = vunpack.c.h.b16 %v517
      %v926 = vunpack.c.l.b16 %v518
      %v927 = vunpack.c.l.b16 %v519
      %v928 = vunpack.c.h.b16 %v519
      %v929 = vunpack.c.l.b16 %v520
      %v930 = vunpack.c.l.b16 %v521
      %v931 = vunpack.c.h.b16 %v521
      %v932 = vunpack.c.l.b16 %v522
      %v933 = vunpack.c.l.b16 %v523
      %v934 = vunpack.c.h.b16 %v523
      %v935 = vunpack.c.l.b16 %v524
      %v936 = vunpack.c.l.b16 %v525
      %v937 = vunpack.c.h.b16 %v525
      %v938 = vunpack.c.l.b16 %v526
      %v939 = vunpack.c.l.b16 %v527
      %v940 = vunpack.c.h.b16 %v527
      %v941 = vunpack.c.l.b16 %v528
      %v942 = vunpack.c.l.b16 %v529
      %v943 = vunpack.c.h.b16 %v529
      %v944 = vunpack.c.l.b16 %v530
      %v945 = vunpack.c.l.b16 %v531
      %v946 = vunpack.c.h.b16 %v531
      %v947 = vunpack.c.l.b16 %v532
      %v948 = vunpack.c.l.b16 %v533
      %v949 = vunpack.c.h.b16 %v533
      %v950 = vunpack.c.l.b16 %v534
      %v951 = vunpack.c.l.b16 %v535
      %v952 = vunpack.c.h.b16 %v535
      %v953 = vunpack.c.l.b16 %v536
      %v954 = vunpack.c.l.b16 %v537
      %v955 = vunpack.c.h.b16 %v537
      %v956 = vunpack.c.l.b16 %v538
      %v957 = vunpack.c.l.b16 %v539
      %v958 = vunpack.c.h.b16 %v539
      %v959 = vunpack.c.l.b16 %v540
      %v960 = vunpack.c.l.b16 %v541
      %v961 = vunpack.c.h.b16 %v541
      %v962 = vunpack.c.l.b16 %v542
      %v963 = vunpack.c.l.b16 %v543
      %v964 = vunpack.c.h.b16 %v543
      %v965 = vunpack.c.l.b16 %v544
      %v966 = vunpack.c.l.b16 %v545
      %v967 = vunpack.c.h.b16 %v545
      %v968 = vunpack.c.l.b16 %v546
      %v969 = vunpack.c.l.b16 %v547
      %v970 = vunpack.c.h.b16 %v547
      %v971 = vunpack.c.l.b16 %v548
      %v972 = vunpack.c.l.b16 %v549
      %v973 = vunpack.c.h.b16 %v549
      %v974 = vunpack.c.l.b16 %v550
      %v975 = vunpack.c.l.b16 %v551
      %v976 = vunpack.c.h.b16 %v551
      %v977 = vunpack.c.l.b16 %v552
      %v978 = vunpack.c.l.b16 %v553
      %v979 = vunpack.c.h.b16 %v553
      %v980 = vunpack.c.l.b16 %v554
      %v981 = vunpack.c.l.b16 %v555
      %v982 = vunpack.c.h.b16 %v555
      %v983 = vunpack.c.l.b16 %v556
      %v984 = vunpack.c.l.b16 %v557
      %v985 = vunpack.c.h.b16 %v557
      %v986 = vunpack.c.l.b16 %v558
      %v987 = vunpack.c.l.b16 %v559
      %v988 = vunpack.c.h.b16 %v559
      %v989 = vunpack.c.l.b16 %v560
      %v990 = vunpack.c.l.b16 %v561
      %v991 = vunpack.c.h.b16 %v561
      %v992 = vunpack.c.l.b16 %v562
      %v993 = vpack.c.b16 %v738, %v735
      %v994 = vpack.c.b16 %v739, %v736
      %v995 = vpack.c.b16 %v740, %v737
      %v996 = vpack.c.b16 %v744, %v741
      %v997 = vpack.c.b16 %v745, %v742
      %v998 = vpack.c.b16 %v746, %v743
      %v999 = vpack.c.b16 %v750, %v747
      %v1000 = vpack.c.b16 %v751, %v748
      %v1001 = vpack.c.b16 %v752, %v749
      %v1002 = vpack.c.b16 %v756, %v753
      %v1003 = vpack.c.b16 %v757, %v754
      %v1004 = vpack.c.b16 %v758, %v755
      %v1005 = vpack.c.b16 %v762, %v759
      %v1006 = vpack.c.b16 %v763, %v760
      %v1007 = vpack.c.b16 %v764, %v761
      %v1008 = vpack.c.b16 %v768, %v765
      %v1009 = vpack.c.b16 %v769, %v766
      %v1010 = vpack.c.b16 %v770, %v767
      %v1011 = vpack.c.b16 %v774, %v771
      %v1012 = vpack.c.b16 %v775, %v772
      %v1013 = vpack.c.b16 %v776, %v773
      %v1014 = vpack.c.b16 %v780, %v777
      %v1015 = vpack.c.b16 %v781, %v778
      %v1016 = vpack.c.b16 %v782, %v779
      %v1017 = vpack.c.b16 %v786, %v783
      %v1018 = vpack.c.b16 %v787, %v784
      %v1019 = vpack.c.b16 %v788, %v785
      %v1020 = vpack.c.b16 %v792, %v789
      %v1021 = vpack.c.b16 %v793, %v790
      %v1022 = vpack.c.b16 %v794, %v791
      %v1023 = vpack.c.b16 %v798, %v795
      %v1024 = vpack.c.b16 %v799, %v796
      %v1025 = vpack.c.b16 %v800, %v797
      %v1026 = vpack.c.b16 %v804, %v801
      %v1027 = vpack.c.b16 %v805, %v802
      %v1028 = vpack.c.b16 %v806, %v803
      %v1029 = vpack.c.b16 %v810, %v807
      %v1030 = vpack.c.b16 %v811, %v808
      %v1031 = vpack.c.b16 %v812, %v809
      %v1032 = vpack.c.b16 %v816, %v813
      %v1033 = vpack.c.b16 %v817, %v814
      %v1034 = vpack.c.b16 %v818, %v815
      %v1035 = vpack.c.b16 %v822, %v819
      %v1036 = vpack.c.b16 %v823, %v820
      %v1037 = vpack.c.b16 %v824, %v821
      %v1038 = vpack.c.b16 %v828, %v825
      %v1039 = vpack.c.b16 %v829, %v826
      %v1040 = vpack.c.b16 %v830, %v827
      %v1041 = vpack.c.b16 %v834, %v831
      %v1042 = vpack.c.b16 %v835, %v832
      %v1043 = vpack.c.b16 %v836, %v833
      %v1044 = vpack.c.b16 %v840, %v837
      %v1045 = vpack.c.b16 %v841, %v838
      %v1046 = vpack.c.b16 %v842, %v839
      %v1047 = vpack.c.b16 %v846, %v843
      %v1048 = vpack.c.b16 %v847, %v844
      %v1049 = vpack.c.b16 %v848, %v845
      %v1050 = vpack.c.b16 %v852, %v849
      %v1051 = vpack.c.b16 %v853, %v850
      %v1052 = vpack.c.b16 %v854, %v851
      %v1053 = vpack.c.b16 %v858, %v855
      %v1054 = vpack.c.b16 %v859, %v856
      %v1055 = vpack.c.b16 %v860, %v857
      %v1056 = vpack.c.b16 %v864, %v861
      %v1057 = vpack.c.b16 %v865, %v862
      %v1058 = vpack.c.b16 %v866, %v863
      %v1059 = vpack.c.b16 %v870, %v867
      %v1060 = vpack.c.b16 %v871, %v868
      %v1061 = vpack.c.b16 %v872, %v869
      %v1062 = vpack.c.b16 %v876, %v873
      %v1063 = vpack.c.b16 %v877, %v874
      %v1064 = vpack.c.b16 %v878, %v875
      %v1065 = vpack.c.b16 %v882, %v879
      %v1066 = vpack.c.b16 %v883, %v880
      %v1067 = vpack.c.b16 %v884, %v881
      %v1068 = vpack.c.b16 %v888, %v885
      %v1069 = vpack.c.b16 %v889, %v886
      %v1070 = vpack.c.b16 %v890, %v887
      %v1071 = vpack.c.b16 %v894, %v891
      %v1072 = vpack.c.b16 %v895, %v892
      %v1073 = vpack.c.b16 %v896, %v893
      %v1074 = vpack.c.b16 %v900, %v897
      %v1075 = vpack.c.b16 %v901, %v898
      %v1076 = vpack.c.b16 %v902, %v899
      %v1077 = vpack.c.b16 %v906, %v903
      %v1078 = vpack.c.b16 %v907, %v904
      %v1079 = vpack.c.b16 %v908, %v905
      %v1080 = vpack.c.b16 %v912, %v909
      %v1081 = vpack.c.b16 %v913, %v910
      %v1082 = vpack.c.b16 %v914, %v911
      %v1083 = vpack.c.b16 %v918, %v915
      %v1084 = vpack.c.b16 %v919, %v916
      %v1085 = vpack.c.b16 %v920, %v917
      %v1086 = vpack.c.b16 %v924, %v921
      %v1087 = vpack.c.b16 %v925, %v922
      %v1088 = vpack.c.b16 %v926, %v923
      %v1089 = vpack.c.b16 %v930, %v927
      %v1090 = vpack.c.b16 %v931, %v928
      %v1091 = vpack.c.b16 %v932, %v929
      %v1092 = vpack.c.b16 %v936, %v933
      %v1093 = vpack.c.b16 %v937, %v934
      %v1094 = vpack.c.b16 %v938, %v935
      %v1095 = vpack.c.b16 %v942, %v939
      %v1096 = vpack.c.b16 %v943, %v940
      %v1097 = vpack.c.b16 %v944, %v941
      %v1098 = vpack.c.b16 %v948, %v945
      %v1099 = vpack.c.b16 %v949, %v946
      %v1100 = vpack.c.b16 %v950, %v947
      %v1101 = vpack.c.b16 %v954, %v951
      %v1102 = vpack.c.b16 %v955, %v952
      %v1103 = vpack.c.b16 %v956, %v953
      %v1104 = vpack.c.b16 %v960, %v957
      %v1105 = vpack.c.b16 %v961, %v958
      %v1106 = vpack.c.b16 %v962, %v959
      %v1107 = vpack.c.b16 %v966, %v963
      %v1108 = vpack.c.b16 %v967, %v964
      %v1109 = vpack.c.b16 %v968, %v965
      %v1110 = vpack.c.b16 %v972, %v969
      %v1111 = vpack.c.b16 %v973, %v970
      %v1112 = vpack.c.b16 %v974, %v971
      %v1113 = vpack.c.b16 %v978, %v975
      %v1114 = vpack.c.b16 %v979, %v976
      %v1115 = vpack.c.b16 %v980, %v977
      %v1116 = vpack.c.b16 %v984, %v981
      %v1117 = vpack.c.b16 %v985, %v982
      %v1118 = vpack.c.b16 %v986, %v983
      %v1119 = vpack.c.b16 %v990, %v987
      %v1120 = vpack.c.b16 %v991, %v988
      %v1121 = vpack.c.b16 %v992, %v989
      %vm1208 = vcmask 719872
      %v1210 = vsel %vm1208, %v995, 0
      %v1213 = vsel %vm1208, %v998, 0
      %v1216 = vsel %vm1208, %v1001, 0
      %v1219 = vsel %vm1208, %v1004, 0
      %v1222 = vsel %vm1208, %v1007, 0
      %v1225 = vsel %vm1208, %v1010, 0
      %v1228 = vsel %vm1208, %v1013, 0
      %v1231 = vsel %vm1208, %v1016, 0
      %v1234 = vsel %vm1208, %v1019, 0
      %v1237 = vsel %vm1208, %v1022, 0
      %v1240 = vsel %vm1208, %v1025, 0
      %v1243 = vsel %vm1208, %v1028, 0
      %v1246 = vsel %vm1208, %v1031, 0
      %v1249 = vsel %vm1208, %v1034, 0
      %v1252 = vsel %vm1208, %v1037, 0
      %v1255 = vsel %vm1208, %v1040, 0
      %v1258 = vsel %vm1208, %v1043, 0
      %v1261 = vsel %vm1208, %v1046, 0
      %v1264 = vsel %vm1208, %v1049, 0
      %v1267 = vsel %vm1208, %v1052, 0
      %v1270 = vsel %vm1208, %v1055, 0
      %v1273 = vsel %vm1208, %v1058, 0
      %v1276 = vsel %vm1208, %v1061, 0
      %v1279 = vsel %vm1208, %v1064, 0
      %v1282 = vsel %vm1208, %v1067, 0
      %v1285 = vsel %vm1208, %v1070, 0
      %v1288 = vsel %vm1208, %v1073, 0
      %v1291 = vsel %vm1208, %v1076, 0
      %v1294 = vsel %vm1208, %v1079, 0
      %v1297 = vsel %vm1208, %v1082, 0
      %v1300 = vsel %vm1208, %v1085, 0
      %v1303 = vsel %vm1208, %v1088, 0
      %v1306 = vsel %vm1208, %v1091, 0
      %v1309 = vsel %vm1208, %v1094, 0
      %v1312 = vsel %vm1208, %v1097, 0
      %v1315 = vsel %vm1208, %v1100, 0
      %v1318 = vsel %vm1208, %v1103, 0
      %v1321 = vsel %vm1208, %v1106, 0
      %v1324 = vsel %vm1208, %v1109, 0
      %v1327 = vsel %vm1208, %v1112, 0
      %v1330 = vsel %vm1208, %v1115, 0
      %v1333 = vsel %vm1208, %v1118, 0
      %v1336 = vsel %vm1208, %v1121, 0
      %vm1338 = vcmask 1043456
      %v1340 = vsel %vm1338, %v390, 0
      %1342 = vmatprep.subr.bf16.mxu0 0
      %1343 = vmatpush1.bf16.msra.mxu0 %v376
      %1344 = vmatprep.subr.bf16.mxu0 0
      %1345 = vmatpush1.bf16.msra.mxu0 %v375
      %1346 = vmatprep.subr.bf16.mxu0 0
      %1347 = vmatpush1.bf16.msra.mxu0 %v374
      %1348 = vmatprep.subr.bf16.mxu0 0
      %1349 = vmatpush1.bf16.msra.mxu0 %v373
      %1350 = vmatprep.subr.bf16.mxu0 0
      %1351 = vmatpush1.bf16.msra.mxu0 %v372
      %1352 = vmatprep.subr.bf16.mxu0 0
      %1353 = vmatpush1.bf16.msra.mxu0 %v371
      %1354 = vmatprep.subr.bf16.mxu0 0
      %1355 = vmatpush1.bf16.msra.mxu0 %v370
      %1356 = vmatprep.subr.bf16.mxu0 0
      %1357 = vmatpush1.bf16.msra.mxu0 %v369
      %1358 = vmatprep.subr.bf16.mxu0 0
      %1359 = vmatpush2.bf16.msra.mxu0 %v384
      %1360 = vmatprep.subr.bf16.mxu0 0
      %1361 = vmatpush2.bf16.msra.mxu0 %v383
      %1362 = vmatprep.subr.bf16.mxu0 0
      %1363 = vmatpush2.bf16.msra.mxu0 %v382
      %1364 = vmatprep.subr.bf16.mxu0 0
      %1365 = vmatpush2.bf16.msra.mxu0 %v381
      %1366 = vmatprep.subr.bf16.mxu0 0
      %1367 = vmatpush2.bf16.msra.mxu0 %v380
      %1368 = vmatprep.subr.bf16.mxu0 0
      %1369 = vmatpush2.bf16.msra.mxu0 %v379
      %1370 = vmatprep.subr.bf16.mxu0 0
      %1371 = vmatpush2.bf16.msra.mxu0 %v378
      %1372 = vmatprep.subr.bf16.mxu0 0
      %1373 = vmatpush2.bf16.msra.mxu0 %v377
      %1374 = vmatprep.mubr.bf16.mxu0 %v994
      %1375 = vmatmul.mubr.bf16.gmra.mxu0 %v993
      %v1376 = vpop.f32.mrf.mxu0
      %v1377 = vadd.f32 0.0, %v1376
      %v1378 = vpop.f32.mrf.mxu0
      %v1379 = vpop.f32.mrf.mxu0
      %v1380 = vadd.f32 0.0, %v1379
      %v1381 = vpop.f32.mrf.mxu0
      %1382 = vmatprep.mubr.bf16.mxu0 %v997
      %1383 = vmatmul.mubr.bf16.gmra.mxu0 %v996
      %v1384 = vpop.f32.mrf.mxu0
      %v1385 = vadd.f32 0.0, %v1384
      %v1386 = vpop.f32.mrf.mxu0
      %v1387 = vpop.f32.mrf.mxu0
      %v1388 = vadd.f32 0.0, %v1387
      %v1389 = vpop.f32.mrf.mxu0
      %1390 = vmatprep.mubr.bf16.mxu0 %v1000
      %1391 = vmatmul.mubr.bf16.gmra.mxu0 %v999
      %v1392 = vpop.f32.mrf.mxu0
      %v1393 = vadd.f32 0.0, %v1392
      %v1394 = vpop.f32.mrf.mxu0
      %v1395 = vpop.f32.mrf.mxu0
      %v1396 = vadd.f32 0.0, %v1395
      %v1397 = vpop.f32.mrf.mxu0
      %1398 = vmatprep.mubr.bf16.mxu0 %v1003
      %1399 = vmatmul.mubr.bf16.gmra.mxu0 %v1002
      %v1400 = vpop.f32.mrf.mxu0
      %v1401 = vadd.f32 0.0, %v1400
      %v1402 = vpop.f32.mrf.mxu0
      %v1403 = vpop.f32.mrf.mxu0
      %v1404 = vadd.f32 0.0, %v1403
      %v1405 = vpop.f32.mrf.mxu0
      %1406 = vmatprep.mubr.bf16.mxu0 %v1006
      %1407 = vmatmul.mubr.bf16.gmra.mxu0 %v1005
      %v1408 = vpop.f32.mrf.mxu0
      %v1409 = vadd.f32 0.0, %v1408
      %v1410 = vpop.f32.mrf.mxu0
      %v1411 = vpop.f32.mrf.mxu0
      %v1412 = vadd.f32 0.0, %v1411
      %v1413 = vpop.f32.mrf.mxu0
      %1414 = vmatprep.mubr.bf16.mxu0 %v1009
      %1415 = vmatmul.mubr.bf16.gmra.mxu0 %v1008
      %v1416 = vpop.f32.mrf.mxu0
      %v1417 = vadd.f32 0.0, %v1416
      %v1418 = vpop.f32.mrf.mxu0
      %v1419 = vpop.f32.mrf.mxu0
      %v1420 = vadd.f32 0.0, %v1419
      %v1421 = vpop.f32.mrf.mxu0
      %1422 = vmatprep.mubr.bf16.mxu0 %v1012
      %1423 = vmatmul.mubr.bf16.gmra.mxu0 %v1011
      %v1424 = vpop.f32.mrf.mxu0
      %v1425 = vadd.f32 0.0, %v1424
      %v1426 = vpop.f32.mrf.mxu0
      %v1427 = vpop.f32.mrf.mxu0
      %v1428 = vadd.f32 0.0, %v1427
      %v1429 = vpop.f32.mrf.mxu0
      %1430 = vmatprep.mubr.bf16.mxu0 %v1015
      %1431 = vmatmul.mubr.bf16.gmra.mxu0 %v1014
      %v1432 = vpop.f32.mrf.mxu0
      %v1433 = vadd.f32 0.0, %v1432
      %v1434 = vpop.f32.mrf.mxu0
      %v1435 = vpop.f32.mrf.mxu0
      %v1436 = vadd.f32 0.0, %v1435
      %v1437 = vpop.f32.mrf.mxu0
      %1438 = vmatprep.mubr.bf16.mxu0 %v1018
      %1439 = vmatmul.mubr.bf16.gmra.mxu0 %v1017
      %v1440 = vpop.f32.mrf.mxu0
      %v1441 = vadd.f32 0.0, %v1440
      %v1442 = vpop.f32.mrf.mxu0
      %v1443 = vpop.f32.mrf.mxu0
      %v1444 = vadd.f32 0.0, %v1443
      %v1445 = vpop.f32.mrf.mxu0
      %1446 = vmatprep.mubr.bf16.mxu0 %v1021
      %1447 = vmatmul.mubr.bf16.gmra.mxu0 %v1020
      %v1448 = vpop.f32.mrf.mxu0
      %v1449 = vadd.f32 0.0, %v1448
      %v1450 = vpop.f32.mrf.mxu0
      %v1451 = vpop.f32.mrf.mxu0
      %v1452 = vadd.f32 0.0, %v1451
      %v1453 = vpop.f32.mrf.mxu0
      %1454 = vmatprep.mubr.bf16.mxu0 %v1024
      %1455 = vmatmul.mubr.bf16.gmra.mxu0 %v1023
      %v1456 = vpop.f32.mrf.mxu0
      %v1457 = vadd.f32 0.0, %v1456
      %v1458 = vpop.f32.mrf.mxu0
      %v1459 = vpop.f32.mrf.mxu0
      %v1460 = vadd.f32 0.0, %v1459
      %v1461 = vpop.f32.mrf.mxu0
      %1462 = vmatprep.mubr.bf16.mxu0 %v1027
      %1463 = vmatmul.mubr.bf16.gmra.mxu0 %v1026
      %v1464 = vpop.f32.mrf.mxu0
      %v1465 = vadd.f32 0.0, %v1464
      %v1466 = vpop.f32.mrf.mxu0
      %v1467 = vpop.f32.mrf.mxu0
      %v1468 = vadd.f32 0.0, %v1467
      %v1469 = vpop.f32.mrf.mxu0
      %1470 = vmatprep.mubr.bf16.mxu0 %v1030
      %1471 = vmatmul.mubr.bf16.gmra.mxu0 %v1029
      %v1472 = vpop.f32.mrf.mxu0
      %v1473 = vadd.f32 0.0, %v1472
      %v1474 = vpop.f32.mrf.mxu0
      %v1475 = vpop.f32.mrf.mxu0
      %v1476 = vadd.f32 0.0, %v1475
      %v1477 = vpop.f32.mrf.mxu0
      %1478 = vmatprep.mubr.bf16.mxu0 %v1033
      %1479 = vmatmul.mubr.bf16.gmra.mxu0 %v1032
      %v1480 = vpop.f32.mrf.mxu0
      %v1481 = vadd.f32 0.0, %v1480
      %v1482 = vpop.f32.mrf.mxu0
      %v1483 = vpop.f32.mrf.mxu0
      %v1484 = vadd.f32 0.0, %v1483
      %v1485 = vpop.f32.mrf.mxu0
      %1486 = vmatprep.mubr.bf16.mxu0 %v1036
      %1487 = vmatmul.mubr.bf16.gmra.mxu0 %v1035
      %v1488 = vpop.f32.mrf.mxu0
      %v1489 = vadd.f32 0.0, %v1488
      %v1490 = vpop.f32.mrf.mxu0
      %v1491 = vpop.f32.mrf.mxu0
      %v1492 = vadd.f32 0.0, %v1491
      %v1493 = vpop.f32.mrf.mxu0
      %1494 = vmatprep.mubr.bf16.mxu0 %v1039
      %1495 = vmatmul.mubr.bf16.gmra.mxu0 %v1038
      %v1496 = vpop.f32.mrf.mxu0
      %v1497 = vadd.f32 0.0, %v1496
      %v1498 = vpop.f32.mrf.mxu0
      %v1499 = vpop.f32.mrf.mxu0
      %v1500 = vadd.f32 0.0, %v1499
      %v1501 = vpop.f32.mrf.mxu0
      %1502 = vmatprep.mubr.bf16.mxu0 %v1042
      %1503 = vmatmul.mubr.bf16.gmra.mxu0 %v1041
      %v1504 = vpop.f32.mrf.mxu0
      %v1505 = vadd.f32 0.0, %v1504
      %v1506 = vpop.f32.mrf.mxu0
      %v1507 = vpop.f32.mrf.mxu0
      %v1508 = vadd.f32 0.0, %v1507
      %v1509 = vpop.f32.mrf.mxu0
      %1510 = vmatprep.mubr.bf16.mxu0 %v1045
      %1511 = vmatmul.mubr.bf16.gmra.mxu0 %v1044
      %v1512 = vpop.f32.mrf.mxu0
      %v1513 = vadd.f32 0.0, %v1512
      %v1514 = vpop.f32.mrf.mxu0
      %v1515 = vpop.f32.mrf.mxu0
      %v1516 = vadd.f32 0.0, %v1515
      %v1517 = vpop.f32.mrf.mxu0
      %1518 = vmatprep.mubr.bf16.mxu0 %v1048
      %1519 = vmatmul.mubr.bf16.gmra.mxu0 %v1047
      %v1520 = vpop.f32.mrf.mxu0
      %v1521 = vadd.f32 0.0, %v1520
      %v1522 = vpop.f32.mrf.mxu0
      %v1523 = vpop.f32.mrf.mxu0
      %v1524 = vadd.f32 0.0, %v1523
      %v1525 = vpop.f32.mrf.mxu0
      %1526 = vmatprep.mubr.bf16.mxu0 %v1051
      %1527 = vmatmul.mubr.bf16.gmra.mxu0 %v1050
      %v1528 = vpop.f32.mrf.mxu0
      %v1529 = vadd.f32 0.0, %v1528
      %v1530 = vpop.f32.mrf.mxu0
      %v1531 = vpop.f32.mrf.mxu0
      %v1532 = vadd.f32 0.0, %v1531
      %v1533 = vpop.f32.mrf.mxu0
      %1534 = vmatprep.mubr.bf16.mxu0 %v1054
      %1535 = vmatmul.mubr.bf16.gmra.mxu0 %v1053
      %v1536 = vpop.f32.mrf.mxu0
      %v1537 = vadd.f32 0.0, %v1536
      %v1538 = vpop.f32.mrf.mxu0
      %v1539 = vpop.f32.mrf.mxu0
      %v1540 = vadd.f32 0.0, %v1539
      %v1541 = vpop.f32.mrf.mxu0
      %1542 = vmatprep.mubr.bf16.mxu0 %v1057
      %1543 = vmatmul.mubr.bf16.gmra.mxu0 %v1056
      %v1544 = vpop.f32.mrf.mxu0
      %v1545 = vadd.f32 0.0, %v1544
      %v1546 = vpop.f32.mrf.mxu0
      %v1547 = vpop.f32.mrf.mxu0
      %v1548 = vadd.f32 0.0, %v1547
      %v1549 = vpop.f32.mrf.mxu0
      %1550 = vmatprep.mubr.bf16.mxu0 %v1060
      %1551 = vmatmul.mubr.bf16.gmra.mxu0 %v1059
      %v1552 = vpop.f32.mrf.mxu0
      %v1553 = vadd.f32 0.0, %v1552
      %v1554 = vpop.f32.mrf.mxu0
      %v1555 = vpop.f32.mrf.mxu0
      %v1556 = vadd.f32 0.0, %v1555
      %v1557 = vpop.f32.mrf.mxu0
      %1558 = vmatprep.mubr.bf16.mxu0 %v1063
      %1559 = vmatmul.mubr.bf16.gmra.mxu0 %v1062
      %v1560 = vpop.f32.mrf.mxu0
      %v1561 = vadd.f32 0.0, %v1560
      %v1562 = vpop.f32.mrf.mxu0
      %v1563 = vpop.f32.mrf.mxu0
      %v1564 = vadd.f32 0.0, %v1563
      %v1565 = vpop.f32.mrf.mxu0
      %1566 = vmatprep.mubr.bf16.mxu0 %v1066
      %1567 = vmatmul.mubr.bf16.gmra.mxu0 %v1065
      %v1568 = vpop.f32.mrf.mxu0
      %v1569 = vadd.f32 0.0, %v1568
      %v1570 = vpop.f32.mrf.mxu0
      %v1571 = vpop.f32.mrf.mxu0
      %v1572 = vadd.f32 0.0, %v1571
      %v1573 = vpop.f32.mrf.mxu0
      %1574 = vmatprep.mubr.bf16.mxu0 %v1069
      %1575 = vmatmul.mubr.bf16.gmra.mxu0 %v1068
      %v1576 = vpop.f32.mrf.mxu0
      %v1577 = vadd.f32 0.0, %v1576
      %v1578 = vpop.f32.mrf.mxu0
      %v1579 = vpop.f32.mrf.mxu0
      %v1580 = vadd.f32 0.0, %v1579
      %v1581 = vpop.f32.mrf.mxu0
      %1582 = vmatprep.mubr.bf16.mxu0 %v1072
      %1583 = vmatmul.mubr.bf16.gmra.mxu0 %v1071
      %v1584 = vpop.f32.mrf.mxu0
      %v1585 = vadd.f32 0.0, %v1584
      %v1586 = vpop.f32.mrf.mxu0
      %v1587 = vpop.f32.mrf.mxu0
      %v1588 = vadd.f32 0.0, %v1587
      %v1589 = vpop.f32.mrf.mxu0
      %1590 = vmatprep.mubr.bf16.mxu0 %v1075
      %1591 = vmatmul.mubr.bf16.gmra.mxu0 %v1074
      %v1592 = vpop.f32.mrf.mxu0
      %v1593 = vadd.f32 0.0, %v1592
      %v1594 = vpop.f32.mrf.mxu0
      %v1595 = vpop.f32.mrf.mxu0
      %v1596 = vadd.f32 0.0, %v1595
      %v1597 = vpop.f32.mrf.mxu0
      %1598 = vmatprep.mubr.bf16.mxu0 %v1078
      %1599 = vmatmul.mubr.bf16.gmra.mxu0 %v1077
      %v1600 = vpop.f32.mrf.mxu0
      %v1601 = vadd.f32 0.0, %v1600
      %v1602 = vpop.f32.mrf.mxu0
      %v1603 = vpop.f32.mrf.mxu0
      %v1604 = vadd.f32 0.0, %v1603
      %v1605 = vpop.f32.mrf.mxu0
      %1606 = vmatprep.mubr.bf16.mxu0 %v1081
      %1607 = vmatmul.mubr.bf16.gmra.mxu0 %v1080
      %v1608 = vpop.f32.mrf.mxu0
      %v1609 = vadd.f32 0.0, %v1608
      %v1610 = vpop.f32.mrf.mxu0
      %v1611 = vpop.f32.mrf.mxu0
      %v1612 = vadd.f32 0.0, %v1611
      %v1613 = vpop.f32.mrf.mxu0
      %1614 = vmatprep.mubr.bf16.mxu0 %v1084
      %1615 = vmatmul.mubr.bf16.gmra.mxu0 %v1083
      %v1616 = vpop.f32.mrf.mxu0
      %v1617 = vadd.f32 0.0, %v1616
      %v1618 = vpop.f32.mrf.mxu0
      %v1619 = vpop.f32.mrf.mxu0
      %v1620 = vadd.f32 0.0, %v1619
      %v1621 = vpop.f32.mrf.mxu0
      %1622 = vmatprep.mubr.bf16.mxu0 %v1087
      %1623 = vmatmul.mubr.bf16.gmra.mxu0 %v1086
      %v1624 = vpop.f32.mrf.mxu0
      %v1625 = vadd.f32 0.0, %v1624
      %v1626 = vpop.f32.mrf.mxu0
      %v1627 = vpop.f32.mrf.mxu0
      %v1628 = vadd.f32 0.0, %v1627
      %v1629 = vpop.f32.mrf.mxu0
      %1630 = vmatprep.mubr.bf16.mxu0 %v1090
      %1631 = vmatmul.mubr.bf16.gmra.mxu0 %v1089
      %v1632 = vpop.f32.mrf.mxu0
      %v1633 = vadd.f32 0.0, %v1632
      %v1634 = vpop.f32.mrf.mxu0
      %v1635 = vpop.f32.mrf.mxu0
      %v1636 = vadd.f32 0.0, %v1635
      %v1637 = vpop.f32.mrf.mxu0
      %1638 = vmatprep.mubr.bf16.mxu0 %v1093
      %1639 = vmatmul.mubr.bf16.gmra.mxu0 %v1092
      %v1640 = vpop.f32.mrf.mxu0
      %v1641 = vadd.f32 0.0, %v1640
      %v1642 = vpop.f32.mrf.mxu0
      %v1643 = vpop.f32.mrf.mxu0
      %v1644 = vadd.f32 0.0, %v1643
      %v1645 = vpop.f32.mrf.mxu0
      %1646 = vmatprep.mubr.bf16.mxu0 %v1096
      %1647 = vmatmul.mubr.bf16.gmra.mxu0 %v1095
      %v1648 = vpop.f32.mrf.mxu0
      %v1649 = vadd.f32 0.0, %v1648
      %v1650 = vpop.f32.mrf.mxu0
      %v1651 = vpop.f32.mrf.mxu0
      %v1652 = vadd.f32 0.0, %v1651
      %v1653 = vpop.f32.mrf.mxu0
      %1654 = vmatprep.mubr.bf16.mxu0 %v1099
      %1655 = vmatmul.mubr.bf16.gmra.mxu0 %v1098
      %v1656 = vpop.f32.mrf.mxu0
      %v1657 = vadd.f32 0.0, %v1656
      %v1658 = vpop.f32.mrf.mxu0
      %v1659 = vpop.f32.mrf.mxu0
      %v1660 = vadd.f32 0.0, %v1659
      %v1661 = vpop.f32.mrf.mxu0
      %1662 = vmatprep.mubr.bf16.mxu0 %v1102
      %1663 = vmatmul.mubr.bf16.gmra.mxu0 %v1101
      %v1664 = vpop.f32.mrf.mxu0
      %v1665 = vadd.f32 0.0, %v1664
      %v1666 = vpop.f32.mrf.mxu0
      %v1667 = vpop.f32.mrf.mxu0
      %v1668 = vadd.f32 0.0, %v1667
      %v1669 = vpop.f32.mrf.mxu0
      %1670 = vmatprep.mubr.bf16.mxu0 %v1105
      %1671 = vmatmul.mubr.bf16.gmra.mxu0 %v1104
      %v1672 = vpop.f32.mrf.mxu0
      %v1673 = vadd.f32 0.0, %v1672
      %v1674 = vpop.f32.mrf.mxu0
      %v1675 = vpop.f32.mrf.mxu0
      %v1676 = vadd.f32 0.0, %v1675
      %v1677 = vpop.f32.mrf.mxu0
      %1678 = vmatprep.mubr.bf16.mxu0 %v1108
      %1679 = vmatmul.mubr.bf16.gmra.mxu0 %v1107
      %v1680 = vpop.f32.mrf.mxu0
      %v1681 = vadd.f32 0.0, %v1680
      %v1682 = vpop.f32.mrf.mxu0
      %v1683 = vpop.f32.mrf.mxu0
      %v1684 = vadd.f32 0.0, %v1683
      %v1685 = vpop.f32.mrf.mxu0
      %1686 = vmatprep.mubr.bf16.mxu0 %v1111
      %1687 = vmatmul.mubr.bf16.gmra.mxu0 %v1110
      %v1688 = vpop.f32.mrf.mxu0
      %v1689 = vadd.f32 0.0, %v1688
      %v1690 = vpop.f32.mrf.mxu0
      %v1691 = vpop.f32.mrf.mxu0
      %v1692 = vadd.f32 0.0, %v1691
      %v1693 = vpop.f32.mrf.mxu0
      %1694 = vmatprep.mubr.bf16.mxu0 %v1114
      %1695 = vmatmul.mubr.bf16.gmra.mxu0 %v1113
      %v1696 = vpop.f32.mrf.mxu0
      %v1697 = vadd.f32 0.0, %v1696
      %v1698 = vpop.f32.mrf.mxu0
      %v1699 = vpop.f32.mrf.mxu0
      %v1700 = vadd.f32 0.0, %v1699
      %v1701 = vpop.f32.mrf.mxu0
      %1702 = vmatprep.mubr.bf16.mxu0 %v1117
      %1703 = vmatmul.mubr.bf16.gmra.mxu0 %v1116
      %v1704 = vpop.f32.mrf.mxu0
      %v1705 = vadd.f32 0.0, %v1704
      %v1706 = vpop.f32.mrf.mxu0
      %v1707 = vpop.f32.mrf.mxu0
      %v1708 = vadd.f32 0.0, %v1707
      %v1709 = vpop.f32.mrf.mxu0
      %1710 = vmatprep.mubr.bf16.mxu0 %v1120
      %1711 = vmatmul.mubr.bf16.gmra.mxu0 %v1119
      %v1712 = vpop.f32.mrf.mxu0
      %v1713 = vadd.f32 0.0, %v1712
      %v1714 = vpop.f32.mrf.mxu0
      %v1715 = vpop.f32.mrf.mxu0
      %v1716 = vadd.f32 0.0, %v1715
      %v1717 = vpop.f32.mrf.mxu0
      %1718 = vdwg.mxu0
      %1719 = vmatprep.subr.bf16.mxu0 0
      %1720 = vmatpush1.bf16.msra.mxu0 0
      %1721 = vmatprep.subr.bf16.mxu0 0
      %1722 = vmatpush1.bf16.msra.mxu0 0
      %1723 = vmatprep.subr.bf16.mxu0 0
      %1724 = vmatpush1.bf16.msra.mxu0 %v1340
      %1725 = vmatprep.subr.bf16.mxu0 0
      %1726 = vmatpush1.bf16.msra.mxu0 %v389
      %1727 = vmatprep.subr.bf16.mxu0 0
      %1728 = vmatpush1.bf16.msra.mxu0 %v388
      %1729 = vmatprep.subr.bf16.mxu0 0
      %1730 = vmatpush1.bf16.msra.mxu0 %v387
      %1731 = vmatprep.subr.bf16.mxu0 0
      %1732 = vmatpush1.bf16.msra.mxu0 %v386
      %1733 = vmatprep.subr.bf16.mxu0 0
      %1734 = vmatpush1.bf16.msra.mxu0 %v385
      %1735 = vmatprep.subr.bf16.mxu0 0
      %1736 = vmatpush2.bf16.msra.mxu0 0
      %1737 = vmatprep.subr.bf16.mxu0 0
      %1738 = vmatpush2.bf16.msra.mxu0 0
      %1739 = vmatprep.subr.bf16.mxu0 0
      %1740 = vmatpush2.bf16.msra.mxu0 0
      %1741 = vmatprep.subr.bf16.mxu0 0
      %1742 = vmatpush2.bf16.msra.mxu0 0
      %1743 = vmatprep.subr.bf16.mxu0 0
      %1744 = vmatpush2.bf16.msra.mxu0 0
      %1745 = vmatprep.subr.bf16.mxu0 0
      %1746 = vmatpush2.bf16.msra.mxu0 0
      %1747 = vmatprep.subr.bf16.mxu0 0
      %1748 = vmatpush2.bf16.msra.mxu0 0
      %1749 = vmatprep.subr.bf16.mxu0 0
      %1750 = vmatpush2.bf16.msra.mxu0 0
      %1751 = vmatprep.mubr.bf16.mxu0 0
      %1752 = vmatmul.mubr.bf16.gmra.mxu0 %v1210
      %v1753 = vpop.f32.mrf.mxu0
      %v1754 = vadd.f32 %v1377, %v1753
      %v1755 = vpop.f32.mrf.mxu0
      %v1756 = vpop.f32.mrf.mxu0
      %v1757 = vadd.f32 %v1380, %v1756
      %v1758 = vpop.f32.mrf.mxu0
      %1759 = vmatprep.mubr.bf16.mxu0 0
      %1760 = vmatmul.mubr.bf16.gmra.mxu0 %v1213
      %v1761 = vpop.f32.mrf.mxu0
      %v1762 = vadd.f32 %v1385, %v1761
      %v1763 = vpop.f32.mrf.mxu0
      %v1764 = vpop.f32.mrf.mxu0
      %v1765 = vadd.f32 %v1388, %v1764
      %v1766 = vpop.f32.mrf.mxu0
      %1767 = vmatprep.mubr.bf16.mxu0 0
      %1768 = vmatmul.mubr.bf16.gmra.mxu0 %v1216
      %v1769 = vpop.f32.mrf.mxu0
      %v1770 = vadd.f32 %v1393, %v1769
      %v1771 = vpop.f32.mrf.mxu0
      %v1772 = vpop.f32.mrf.mxu0
      %v1773 = vadd.f32 %v1396, %v1772
      %v1774 = vpop.f32.mrf.mxu0
      %1775 = vmatprep.mubr.bf16.mxu0 0
      %1776 = vmatmul.mubr.bf16.gmra.mxu0 %v1219
      %v1777 = vpop.f32.mrf.mxu0
      %v1778 = vadd.f32 %v1401, %v1777
      %v1779 = vpop.f32.mrf.mxu0
      %v1780 = vpop.f32.mrf.mxu0
      %v1781 = vadd.f32 %v1404, %v1780
      %v1782 = vpop.f32.mrf.mxu0
      %1783 = vmatprep.mubr.bf16.mxu0 0
      %1784 = vmatmul.mubr.bf16.gmra.mxu0 %v1222
      %v1785 = vpop.f32.mrf.mxu0
      %v1786 = vadd.f32 %v1409, %v1785
      %v1787 = vpop.f32.mrf.mxu0
      %v1788 = vpop.f32.mrf.mxu0
      %v1789 = vadd.f32 %v1412, %v1788
      %v1790 = vpop.f32.mrf.mxu0
      %1791 = vmatprep.mubr.bf16.mxu0 0
      %1792 = vmatmul.mubr.bf16.gmra.mxu0 %v1225
      %v1793 = vpop.f32.mrf.mxu0
      %v1794 = vadd.f32 %v1417, %v1793
      %v1795 = vpop.f32.mrf.mxu0
      %v1796 = vpop.f32.mrf.mxu0
      %v1797 = vadd.f32 %v1420, %v1796
      %v1798 = vpop.f32.mrf.mxu0
      %1799 = vmatprep.mubr.bf16.mxu0 0
      %1800 = vmatmul.mubr.bf16.gmra.mxu0 %v1228
      %v1801 = vpop.f32.mrf.mxu0
      %v1802 = vadd.f32 %v1425, %v1801
      %v1803 = vpop.f32.mrf.mxu0
      %v1804 = vpop.f32.mrf.mxu0
      %v1805 = vadd.f32 %v1428, %v1804
      %v1806 = vpop.f32.mrf.mxu0
      %1807 = vmatprep.mubr.bf16.mxu0 0
      %1808 = vmatmul.mubr.bf16.gmra.mxu0 %v1231
      %v1809 = vpop.f32.mrf.mxu0
      %v1810 = vadd.f32 %v1433, %v1809
      %v1811 = vpop.f32.mrf.mxu0
      %v1812 = vpop.f32.mrf.mxu0
      %v1813 = vadd.f32 %v1436, %v1812
      %v1814 = vpop.f32.mrf.mxu0
      %1815 = vmatprep.mubr.bf16.mxu0 0
      %1816 = vmatmul.mubr.bf16.gmra.mxu0 %v1234
      %v1817 = vpop.f32.mrf.mxu0
      %v1818 = vadd.f32 %v1441, %v1817
      %v1819 = vpop.f32.mrf.mxu0
      %v1820 = vpop.f32.mrf.mxu0
      %v1821 = vadd.f32 %v1444, %v1820
      %v1822 = vpop.f32.mrf.mxu0
      %1823 = vmatprep.mubr.bf16.mxu0 0
      %1824 = vmatmul.mubr.bf16.gmra.mxu0 %v1237
      %v1825 = vpop.f32.mrf.mxu0
      %v1826 = vadd.f32 %v1449, %v1825
      %v1827 = vpop.f32.mrf.mxu0
      %v1828 = vpop.f32.mrf.mxu0
      %v1829 = vadd.f32 %v1452, %v1828
      %v1830 = vpop.f32.mrf.mxu0
      %1831 = vmatprep.mubr.bf16.mxu0 0
      %1832 = vmatmul.mubr.bf16.gmra.mxu0 %v1240
      %v1833 = vpop.f32.mrf.mxu0
      %v1834 = vadd.f32 %v1457, %v1833
      %v1835 = vpop.f32.mrf.mxu0
      %v1836 = vpop.f32.mrf.mxu0
      %v1837 = vadd.f32 %v1460, %v1836
      %v1838 = vpop.f32.mrf.mxu0
      %1839 = vmatprep.mubr.bf16.mxu0 0
      %1840 = vmatmul.mubr.bf16.gmra.mxu0 %v1243
      %v1841 = vpop.f32.mrf.mxu0
      %v1842 = vadd.f32 %v1465, %v1841
      %v1843 = vpop.f32.mrf.mxu0
      %v1844 = vpop.f32.mrf.mxu0
      %v1845 = vadd.f32 %v1468, %v1844
      %v1846 = vpop.f32.mrf.mxu0
      %1847 = vmatprep.mubr.bf16.mxu0 0
      %1848 = vmatmul.mubr.bf16.gmra.mxu0 %v1246
      %v1849 = vpop.f32.mrf.mxu0
      %v1850 = vadd.f32 %v1473, %v1849
      %v1851 = vpop.f32.mrf.mxu0
      %v1852 = vpop.f32.mrf.mxu0
      %v1853 = vadd.f32 %v1476, %v1852
      %v1854 = vpop.f32.mrf.mxu0
      %1855 = vmatprep.mubr.bf16.mxu0 0
      %1856 = vmatmul.mubr.bf16.gmra.mxu0 %v1249
      %v1857 = vpop.f32.mrf.mxu0
      %v1858 = vadd.f32 %v1481, %v1857
      %v1859 = vpop.f32.mrf.mxu0
      %v1860 = vpop.f32.mrf.mxu0
      %v1861 = vadd.f32 %v1484, %v1860
      %v1862 = vpop.f32.mrf.mxu0
      %1863 = vmatprep.mubr.bf16.mxu0 0
      %1864 = vmatmul.mubr.bf16.gmra.mxu0 %v1252
      %v1865 = vpop.f32.mrf.mxu0
      %v1866 = vadd.f32 %v1489, %v1865
      %v1867 = vpop.f32.mrf.mxu0
      %v1868 = vpop.f32.mrf.mxu0
      %v1869 = vadd.f32 %v1492, %v1868
      %v1870 = vpop.f32.mrf.mxu0
      %1871 = vmatprep.mubr.bf16.mxu0 0
      %1872 = vmatmul.mubr.bf16.gmra.mxu0 %v1255
      %v1873 = vpop.f32.mrf.mxu0
      %v1874 = vadd.f32 %v1497, %v1873
      %v1875 = vpop.f32.mrf.mxu0
      %v1876 = vpop.f32.mrf.mxu0
      %v1877 = vadd.f32 %v1500, %v1876
      %v1878 = vpop.f32.mrf.mxu0
      %1879 = vmatprep.mubr.bf16.mxu0 0
      %1880 = vmatmul.mubr.bf16.gmra.mxu0 %v1258
      %v1881 = vpop.f32.mrf.mxu0
      %v1882 = vadd.f32 %v1505, %v1881
      %v1883 = vpop.f32.mrf.mxu0
      %v1884 = vpop.f32.mrf.mxu0
      %v1885 = vadd.f32 %v1508, %v1884
      %v1886 = vpop.f32.mrf.mxu0
      %1887 = vmatprep.mubr.bf16.mxu0 0
      %1888 = vmatmul.mubr.bf16.gmra.mxu0 %v1261
      %v1889 = vpop.f32.mrf.mxu0
      %v1890 = vadd.f32 %v1513, %v1889
      %v1891 = vpop.f32.mrf.mxu0
      %v1892 = vpop.f32.mrf.mxu0
      %v1893 = vadd.f32 %v1516, %v1892
      %v1894 = vpop.f32.mrf.mxu0
      %1895 = vmatprep.mubr.bf16.mxu0 0
      %1896 = vmatmul.mubr.bf16.gmra.mxu0 %v1264
      %v1897 = vpop.f32.mrf.mxu0
      %v1898 = vadd.f32 %v1521, %v1897
      %v1899 = vpop.f32.mrf.mxu0
      %v1900 = vpop.f32.mrf.mxu0
      %v1901 = vadd.f32 %v1524, %v1900
      %v1902 = vpop.f32.mrf.mxu0
      %1903 = vmatprep.mubr.bf16.mxu0 0
      %1904 = vmatmul.mubr.bf16.gmra.mxu0 %v1267
      %v1905 = vpop.f32.mrf.mxu0
      %v1906 = vadd.f32 %v1529, %v1905
      %v1907 = vpop.f32.mrf.mxu0
      %v1908 = vpop.f32.mrf.mxu0
      %v1909 = vadd.f32 %v1532, %v1908
      %v1910 = vpop.f32.mrf.mxu0
      %1911 = vmatprep.mubr.bf16.mxu0 0
      %1912 = vmatmul.mubr.bf16.gmra.mxu0 %v1270
      %v1913 = vpop.f32.mrf.mxu0
      %v1914 = vadd.f32 %v1537, %v1913
      %v1915 = vpop.f32.mrf.mxu0
      %v1916 = vpop.f32.mrf.mxu0
      %v1917 = vadd.f32 %v1540, %v1916
      %v1918 = vpop.f32.mrf.mxu0
      %1919 = vmatprep.mubr.bf16.mxu0 0
      %1920 = vmatmul.mubr.bf16.gmra.mxu0 %v1273
      %v1921 = vpop.f32.mrf.mxu0
      %v1922 = vadd.f32 %v1545, %v1921
      %v1923 = vpop.f32.mrf.mxu0
      %v1924 = vpop.f32.mrf.mxu0
      %v1925 = vadd.f32 %v1548, %v1924
      %v1926 = vpop.f32.mrf.mxu0
      %1927 = vmatprep.mubr.bf16.mxu0 0
      %1928 = vmatmul.mubr.bf16.gmra.mxu0 %v1276
      %v1929 = vpop.f32.mrf.mxu0
      %v1930 = vadd.f32 %v1553, %v1929
      %v1931 = vpop.f32.mrf.mxu0
      %v1932 = vpop.f32.mrf.mxu0
      %v1933 = vadd.f32 %v1556, %v1932
      %v1934 = vpop.f32.mrf.mxu0
      %1935 = vmatprep.mubr.bf16.mxu0 0
      %1936 = vmatmul.mubr.bf16.gmra.mxu0 %v1279
      %v1937 = vpop.f32.mrf.mxu0
      %v1938 = vadd.f32 %v1561, %v1937
      %v1939 = vpop.f32.mrf.mxu0
      %v1940 = vpop.f32.mrf.mxu0
      %v1941 = vadd.f32 %v1564, %v1940
      %v1942 = vpop.f32.mrf.mxu0
      %1943 = vmatprep.mubr.bf16.mxu0 0
      %1944 = vmatmul.mubr.bf16.gmra.mxu0 %v1282
      %v1945 = vpop.f32.mrf.mxu0
      %v1946 = vadd.f32 %v1569, %v1945
      %v1947 = vpop.f32.mrf.mxu0
      %v1948 = vpop.f32.mrf.mxu0
      %v1949 = vadd.f32 %v1572, %v1948
      %v1950 = vpop.f32.mrf.mxu0
      %1951 = vmatprep.mubr.bf16.mxu0 0
      %1952 = vmatmul.mubr.bf16.gmra.mxu0 %v1285
      %v1953 = vpop.f32.mrf.mxu0
      %v1954 = vadd.f32 %v1577, %v1953
      %v1955 = vpop.f32.mrf.mxu0
      %v1956 = vpop.f32.mrf.mxu0
      %v1957 = vadd.f32 %v1580, %v1956
      %v1958 = vpop.f32.mrf.mxu0
      %1959 = vmatprep.mubr.bf16.mxu0 0
      %1960 = vmatmul.mubr.bf16.gmra.mxu0 %v1288
      %v1961 = vpop.f32.mrf.mxu0
      %v1962 = vadd.f32 %v1585, %v1961
      %v1963 = vpop.f32.mrf.mxu0
      %v1964 = vpop.f32.mrf.mxu0
      %v1965 = vadd.f32 %v1588, %v1964
      %v1966 = vpop.f32.mrf.mxu0
      %1967 = vmatprep.mubr.bf16.mxu0 0
      %1968 = vmatmul.mubr.bf16.gmra.mxu0 %v1291
      %v1969 = vpop.f32.mrf.mxu0
      %v1970 = vadd.f32 %v1593, %v1969
      %v1971 = vpop.f32.mrf.mxu0
      %v1972 = vpop.f32.mrf.mxu0
      %v1973 = vadd.f32 %v1596, %v1972
      %v1974 = vpop.f32.mrf.mxu0
      %1975 = vmatprep.mubr.bf16.mxu0 0
      %1976 = vmatmul.mubr.bf16.gmra.mxu0 %v1294
      %v1977 = vpop.f32.mrf.mxu0
      %v1978 = vadd.f32 %v1601, %v1977
      %v1979 = vpop.f32.mrf.mxu0
      %v1980 = vpop.f32.mrf.mxu0
      %v1981 = vadd.f32 %v1604, %v1980
      %v1982 = vpop.f32.mrf.mxu0
      %1983 = vmatprep.mubr.bf16.mxu0 0
      %1984 = vmatmul.mubr.bf16.gmra.mxu0 %v1297
      %v1985 = vpop.f32.mrf.mxu0
      %v1986 = vadd.f32 %v1609, %v1985
      %v1987 = vpop.f32.mrf.mxu0
      %v1988 = vpop.f32.mrf.mxu0
      %v1989 = vadd.f32 %v1612, %v1988
      %v1990 = vpop.f32.mrf.mxu0
      %1991 = vmatprep.mubr.bf16.mxu0 0
      %1992 = vmatmul.mubr.bf16.gmra.mxu0 %v1300
      %v1993 = vpop.f32.mrf.mxu0
      %v1994 = vadd.f32 %v1617, %v1993
      %v1995 = vpop.f32.mrf.mxu0
      %v1996 = vpop.f32.mrf.mxu0
      %v1997 = vadd.f32 %v1620, %v1996
      %v1998 = vpop.f32.mrf.mxu0
      %1999 = vmatprep.mubr.bf16.mxu0 0
      %2000 = vmatmul.mubr.bf16.gmra.mxu0 %v1303
      %v2001 = vpop.f32.mrf.mxu0
      %v2002 = vadd.f32 %v1625, %v2001
      %v2003 = vpop.f32.mrf.mxu0
      %v2004 = vpop.f32.mrf.mxu0
      %v2005 = vadd.f32 %v1628, %v2004
      %v2006 = vpop.f32.mrf.mxu0
      %2007 = vmatprep.mubr.bf16.mxu0 0
      %2008 = vmatmul.mubr.bf16.gmra.mxu0 %v1306
      %v2009 = vpop.f32.mrf.mxu0
      %v2010 = vadd.f32 %v1633, %v2009
      %v2011 = vpop.f32.mrf.mxu0
      %v2012 = vpop.f32.mrf.mxu0
      %v2013 = vadd.f32 %v1636, %v2012
      %v2014 = vpop.f32.mrf.mxu0
      %2015 = vmatprep.mubr.bf16.mxu0 0
      %2016 = vmatmul.mubr.bf16.gmra.mxu0 %v1309
      %v2017 = vpop.f32.mrf.mxu0
      %v2018 = vadd.f32 %v1641, %v2017
      %v2019 = vpop.f32.mrf.mxu0
      %v2020 = vpop.f32.mrf.mxu0
      %v2021 = vadd.f32 %v1644, %v2020
      %v2022 = vpop.f32.mrf.mxu0
      %2023 = vmatprep.mubr.bf16.mxu0 0
      %2024 = vmatmul.mubr.bf16.gmra.mxu0 %v1312
      %v2025 = vpop.f32.mrf.mxu0
      %v2026 = vadd.f32 %v1649, %v2025
      %v2027 = vpop.f32.mrf.mxu0
      %v2028 = vpop.f32.mrf.mxu0
      %v2029 = vadd.f32 %v1652, %v2028
      %v2030 = vpop.f32.mrf.mxu0
      %2031 = vmatprep.mubr.bf16.mxu0 0
      %2032 = vmatmul.mubr.bf16.gmra.mxu0 %v1315
      %v2033 = vpop.f32.mrf.mxu0
      %v2034 = vadd.f32 %v1657, %v2033
      %v2035 = vpop.f32.mrf.mxu0
      %v2036 = vpop.f32.mrf.mxu0
      %v2037 = vadd.f32 %v1660, %v2036
      %v2038 = vpop.f32.mrf.mxu0
      %2039 = vmatprep.mubr.bf16.mxu0 0
      %2040 = vmatmul.mubr.bf16.gmra.mxu0 %v1318
      %v2041 = vpop.f32.mrf.mxu0
      %v2042 = vadd.f32 %v1665, %v2041
      %v2043 = vpop.f32.mrf.mxu0
      %v2044 = vpop.f32.mrf.mxu0
      %v2045 = vadd.f32 %v1668, %v2044
      %v2046 = vpop.f32.mrf.mxu0
      %2047 = vmatprep.mubr.bf16.mxu0 0
      %2048 = vmatmul.mubr.bf16.gmra.mxu0 %v1321
      %v2049 = vpop.f32.mrf.mxu0
      %v2050 = vadd.f32 %v1673, %v2049
      %v2051 = vpop.f32.mrf.mxu0
      %v2052 = vpop.f32.mrf.mxu0
      %v2053 = vadd.f32 %v1676, %v2052
      %v2054 = vpop.f32.mrf.mxu0
      %2055 = vmatprep.mubr.bf16.mxu0 0
      %2056 = vmatmul.mubr.bf16.gmra.mxu0 %v1324
      %v2057 = vpop.f32.mrf.mxu0
      %v2058 = vadd.f32 %v1681, %v2057
      %v2059 = vpop.f32.mrf.mxu0
      %v2060 = vpop.f32.mrf.mxu0
      %v2061 = vadd.f32 %v1684, %v2060
      %v2062 = vpop.f32.mrf.mxu0
      %2063 = vmatprep.mubr.bf16.mxu0 0
      %2064 = vmatmul.mubr.bf16.gmra.mxu0 %v1327
      %v2065 = vpop.f32.mrf.mxu0
      %v2066 = vadd.f32 %v1689, %v2065
      %v2067 = vpop.f32.mrf.mxu0
      %v2068 = vpop.f32.mrf.mxu0
      %v2069 = vadd.f32 %v1692, %v2068
      %v2070 = vpop.f32.mrf.mxu0
      %2071 = vmatprep.mubr.bf16.mxu0 0
      %2072 = vmatmul.mubr.bf16.gmra.mxu0 %v1330
      %v2073 = vpop.f32.mrf.mxu0
      %v2074 = vadd.f32 %v1697, %v2073
      %v2075 = vpop.f32.mrf.mxu0
      %v2076 = vpop.f32.mrf.mxu0
      %v2077 = vadd.f32 %v1700, %v2076
      %v2078 = vpop.f32.mrf.mxu0
      %2079 = vmatprep.mubr.bf16.mxu0 0
      %2080 = vmatmul.mubr.bf16.gmra.mxu0 %v1333
      %v2081 = vpop.f32.mrf.mxu0
      %v2082 = vadd.f32 %v1705, %v2081
      %v2083 = vpop.f32.mrf.mxu0
      %v2084 = vpop.f32.mrf.mxu0
      %v2085 = vadd.f32 %v1708, %v2084
      %v2086 = vpop.f32.mrf.mxu0
      %2087 = vmatprep.mubr.bf16.mxu0 0
      %2088 = vmatmul.mubr.bf16.gmra.mxu0 %v1336
      %v2089 = vpop.f32.mrf.mxu0
      %v2090 = vadd.f32 %v1713, %v2089
      %v2091 = vpop.f32.mrf.mxu0
      %v2092 = vpop.f32.mrf.mxu0
      %v2093 = vadd.f32 %v1716, %v2092
      %v2094 = vpop.f32.mrf.mxu0
      %2095 = vdwg.mxu0
      %vm2096 = vcmask 400384
      %2097 = vst.msk [vmem:[%s237] sm:$0xff] %vm2096, %v1754
      %2098 = vst.msk [vmem:[%s237 + $0x8] sm:$0xff] %vm2096, %v1757
      %2099 = vst.msk [vmem:[%s237 + $0x10] sm:$0xff] %vm2096, %v1762
      %2100 = vst.msk [vmem:[%s237 + $0x18] sm:$0xff] %vm2096, %v1765
      %2101 = vst.msk [vmem:[%s237 + $0x20] sm:$0xff] %vm2096, %v1770
      %2102 = vst.msk [vmem:[%s237 + $0x28] sm:$0xff] %vm2096, %v1773
      %2103 = vst.msk [vmem:[%s237 + $0x30] sm:$0xff] %vm2096, %v1778
      %2104 = vst.msk [vmem:[%s237 + $0x38] sm:$0xff] %vm2096, %v1781
      %2105 = vst.msk [vmem:[%s237 + $0x40] sm:$0xff] %vm2096, %v1786
      %2106 = vst.msk [vmem:[%s237 + $0x48] sm:$0xff] %vm2096, %v1789
      %2107 = vst.msk [vmem:[%s237 + $0x50] sm:$0xff] %vm2096, %v1794
      %2108 = vst.msk [vmem:[%s237 + $0x58] sm:$0xff] %vm2096, %v1797
      %2109 = vst.msk [vmem:[%s237 + $0x60] sm:$0xff] %vm2096, %v1802
      %2110 = vst.msk [vmem:[%s237 + $0x68] sm:$0xff] %vm2096, %v1805
      %2111 = vst.msk [vmem:[%s237 + $0x70] sm:$0xff] %vm2096, %v1810
      %2112 = vst.msk [vmem:[%s237 + $0x78] sm:$0xff] %vm2096, %v1813
      %2113 = vst.msk [vmem:[%s237 + $0x80] sm:$0xff] %vm2096, %v1818
      %2114 = vst.msk [vmem:[%s237 + $0x88] sm:$0xff] %vm2096, %v1821
      %2115 = vst.msk [vmem:[%s237 + $0x90] sm:$0xff] %vm2096, %v1826
      %2116 = vst.msk [vmem:[%s237 + $0x98] sm:$0xff] %vm2096, %v1829
      %2117 = vst.msk [vmem:[%s237 + $0xa0] sm:$0xff] %vm2096, %v1834
      %2118 = vst.msk [vmem:[%s237 + $0xa8] sm:$0xff] %vm2096, %v1837
      %2119 = vst.msk [vmem:[%s237 + $0xb0] sm:$0xff] %vm2096, %v1842
      %2120 = vst.msk [vmem:[%s237 + $0xb8] sm:$0xff] %vm2096, %v1845
      %2121 = vst.msk [vmem:[%s237 + $0xc0] sm:$0xff] %vm2096, %v1850
      %2122 = vst.msk [vmem:[%s237 + $0xc8] sm:$0xff] %vm2096, %v1853
      %2123 = vst.msk [vmem:[%s237 + $0xd0] sm:$0xff] %vm2096, %v1858
      %2124 = vst.msk [vmem:[%s237 + $0xd8] sm:$0xff] %vm2096, %v1861
      %2125 = vst.msk [vmem:[%s237 + $0xe0] sm:$0xff] %vm2096, %v1866
      %2126 = vst.msk [vmem:[%s237 + $0xe8] sm:$0xff] %vm2096, %v1869
      %2127 = vst.msk [vmem:[%s237 + $0xf0] sm:$0xff] %vm2096, %v1874
      %2128 = vst.msk [vmem:[%s237 + $0xf8] sm:$0xff] %vm2096, %v1877
      %2129 = vst.msk [vmem:[%s237 + $0x100] sm:$0xff] %vm2096, %v1882
      %2130 = vst.msk [vmem:[%s237 + $0x108] sm:$0xff] %vm2096, %v1885
      %2131 = vst.msk [vmem:[%s237 + $0x110] sm:$0xff] %vm2096, %v1890
      %2132 = vst.msk [vmem:[%s237 + $0x118] sm:$0xff] %vm2096, %v1893
      %2133 = vst.msk [vmem:[%s237 + $0x120] sm:$0xff] %vm2096, %v1898
      %2134 = vst.msk [vmem:[%s237 + $0x128] sm:$0xff] %vm2096, %v1901
      %2135 = vst.msk [vmem:[%s237 + $0x130] sm:$0xff] %vm2096, %v1906
      %2136 = vst.msk [vmem:[%s237 + $0x138] sm:$0xff] %vm2096, %v1909
      %2137 = vst.msk [vmem:[%s237 + $0x140] sm:$0xff] %vm2096, %v1914
      %2138 = vst.msk [vmem:[%s237 + $0x148] sm:$0xff] %vm2096, %v1917
      %2139 = vst.msk [vmem:[%s237 + $0x150] sm:$0xff] %vm2096, %v1922
      %2140 = vst.msk [vmem:[%s237 + $0x158] sm:$0xff] %vm2096, %v1925
      %2141 = vst.msk [vmem:[%s237 + $0x160] sm:$0xff] %vm2096, %v1930
      %2142 = vst.msk [vmem:[%s237 + $0x168] sm:$0xff] %vm2096, %v1933
      %2143 = vst.msk [vmem:[%s237 + $0x170] sm:$0xff] %vm2096, %v1938
      %2144 = vst.msk [vmem:[%s237 + $0x178] sm:$0xff] %vm2096, %v1941
      %2145 = vst.msk [vmem:[%s237 + $0x180] sm:$0xff] %vm2096, %v1946
      %2146 = vst.msk [vmem:[%s237 + $0x188] sm:$0xff] %vm2096, %v1949
      %2147 = vst.msk [vmem:[%s237 + $0x190] sm:$0xff] %vm2096, %v1954
      %2148 = vst.msk [vmem:[%s237 + $0x198] sm:$0xff] %vm2096, %v1957
      %2149 = vst.msk [vmem:[%s237 + $0x1a0] sm:$0xff] %vm2096, %v1962
      %2150 = vst.msk [vmem:[%s237 + $0x1a8] sm:$0xff] %vm2096, %v1965
      %2151 = vst.msk [vmem:[%s237 + $0x1b0] sm:$0xff] %vm2096, %v1970
      %2152 = vst.msk [vmem:[%s237 + $0x1b8] sm:$0xff] %vm2096, %v1973
      %2153 = vst.msk [vmem:[%s237 + $0x1c0] sm:$0xff] %vm2096, %v1978
      %2154 = vst.msk [vmem:[%s237 + $0x1c8] sm:$0xff] %vm2096, %v1981
      %2155 = vst.msk [vmem:[%s237 + $0x1d0] sm:$0xff] %vm2096, %v1986
      %2156 = vst.msk [vmem:[%s237 + $0x1d8] sm:$0xff] %vm2096, %v1989
      %2157 = vst.msk [vmem:[%s237 + $0x1e0] sm:$0xff] %vm2096, %v1994
      %2158 = vst.msk [vmem:[%s237 + $0x1e8] sm:$0xff] %vm2096, %v1997
      %2159 = vst.msk [vmem:[%s237 + $0x1f0] sm:$0xff] %vm2096, %v2002
      %2160 = vst.msk [vmem:[%s237 + $0x1f8] sm:$0xff] %vm2096, %v2005
      %2161 = vst.msk [vmem:[%s237 + $0x200] sm:$0xff] %vm2096, %v2010
      %2162 = vst.msk [vmem:[%s237 + $0x208] sm:$0xff] %vm2096, %v2013
      %2163 = vst.msk [vmem:[%s237 + $0x210] sm:$0xff] %vm2096, %v2018
      %2164 = vst.msk [vmem:[%s237 + $0x218] sm:$0xff] %vm2096, %v2021
      %2165 = vst.msk [vmem:[%s237 + $0x220] sm:$0xff] %vm2096, %v2026
      %2166 = vst.msk [vmem:[%s237 + $0x228] sm:$0xff] %vm2096, %v2029
      %2167 = vst.msk [vmem:[%s237 + $0x230] sm:$0xff] %vm2096, %v2034
      %2168 = vst.msk [vmem:[%s237 + $0x238] sm:$0xff] %vm2096, %v2037
      %2169 = vst.msk [vmem:[%s237 + $0x240] sm:$0xff] %vm2096, %v2042
      %2170 = vst.msk [vmem:[%s237 + $0x248] sm:$0xff] %vm2096, %v2045
      %2171 = vst.msk [vmem:[%s237 + $0x250] sm:$0xff] %vm2096, %v2050
      %2172 = vst.msk [vmem:[%s237 + $0x258] sm:$0xff] %vm2096, %v2053
      %2173 = vst.msk [vmem:[%s237 + $0x260] sm:$0xff] %vm2096, %v2058
      %2174 = vst.msk [vmem:[%s237 + $0x268] sm:$0xff] %vm2096, %v2061
      %2175 = vst.msk [vmem:[%s237 + $0x270] sm:$0xff] %vm2096, %v2066
      %2176 = vst.msk [vmem:[%s237 + $0x278] sm:$0xff] %vm2096, %v2069
      %2177 = vst.msk [vmem:[%s237 + $0x280] sm:$0xff] %vm2096, %v2074
      %2178 = vst.msk [vmem:[%s237 + $0x288] sm:$0xff] %vm2096, %v2077
      %2179 = vst.msk [vmem:[%s237 + $0x290] sm:$0xff] %vm2096, %v2082
      %2180 = vst.msk [vmem:[%s237 + $0x298] sm:$0xff] %vm2096, %v2085
      %2181 = vst.msk [vmem:[%s237 + $0x2a0] sm:$0xff] %vm2096, %v2090
      %2182 = vst.msk [vmem:[%s237 + $0x2a8] sm:$0xff] %vm2096, %v2093
      %s2183 = smul.u32 86, %s19
      %p2184 = scmp.lt.s32.totalorder %s18, 0
      %s2185 = scalar_select %p2184, %s18, 0
      %p2186 = scmp.lt.s32.totalorder %s2183, 257
      %s2187 = scalar_select %p2186, %s2183, 257
      %s2188 = smul.addr %s2185, 258
      %s2189 = sadd.s32 %s2187, %s2188
      %s2190 = smul.addr %s2189, 8
      %s2191 = scalar_lea.vmem %s3, %s2190
      // Predicated region
      $region33: #{tpu_custom_call.1} parent=31 // pred_check
        %p2192 = pneg %p124
      $region34: #{tpu_custom_call.1} parent=31 // pred_check_branch
        %2194 = sbr.rel (%p2192) target = $region36
      $region35: #{tpu_custom_call.1} parent=31 // pred_region
        %s2195 = smul.u32 86, %s19
      $region36: #{tpu_custom_call.1} parent=31 // pred_fallthru
        _
    $region32: #{tpu_custom_call.1} parent=5 // pred_fallthru
      _
    %p2196 = scmp.le.s32.totalorder 2, %s9
    // Predicated region
    $region37: #{tpu_custom_call.1} parent=5 // pred_check
      %p2197 = pneg %p2196
    $region38: #{tpu_custom_call.1} parent=5 // pred_check_branch
      %2199 = sbr.rel (%p2197) target = $region40
    $region39: #{tpu_custom_call.1} parent=5 // pred_region
      %s2200 = ssub.s32 %s9, 2
      // Predicated region
      $region41: #{tpu_custom_call.1} parent=39 // pred_check
        %p2201 = pneg %p130
      $region42: #{tpu_custom_call.1} parent=39 // pred_check_branch
        %2203 = sbr.rel (%p2201) target = $region44
      $region43: #{tpu_custom_call.1} parent=39 // pred_region
        %s2204 = smul.u32 86, %s21
        %p2205 = scmp.lt.s32.totalorder %s20, 0
        %s2206 = scalar_select %p2205, %s20, 0
        %p2207 = scmp.lt.s32.totalorder %s2204, 257
        %s2208 = scalar_select %p2207, %s2204, 257
        %s2209 = smul.addr %s2206, 258
        %s2210 = sadd.s32 %s2208, %s2209
        %s2211 = smul.addr %s2210, 8
        %s2212 = scalar_lea.vmem %s3, %s2211
      $region44: #{tpu_custom_call.1} parent=39 // pred_fallthru
        _
    $region40: #{tpu_custom_call.1} parent=5 // pred_fallthru
      _
  $region6: #{tpu_custom_call.1} parent=0 // loop_footer
    %s13 = sadd.s32 1, %s9
  $region7: #{tpu_custom_call.1} parent=0 // loop_footer_branch
    %8 = sbr.rel target = $region3
  $region8: #{tpu_custom_call.1} parent=0 // loop_exit
    _

</llo_original>
